<compile_context>
chip_gen: v6e
topology: v6e:2x2x1
jax: 0.10.0
libtpu: 0.0.40
codegen_flags: <defaults>
</compile_context>

<pallas_src>
import functools

import numpy as np
import jax
import jax.numpy as jnp
from jax.experimental import pallas as pl
from jax.experimental.pallas import tpu as pltpu


def _lstm_head_kernel(x_ref, wih0_ref, wbig_ref, bias_ref, h0_ref, c0_ref,
                      wout_ref, bout_ref, out_ref, hn_ref, cn_ref,
                      *, T, BP, L, H):
    """Wavefronted LSTM (num_layers) + Linear + log_softmax, all in VMEM values.

    x_ref    : (T*BP, I)         flattened time-major input (row = t*BP + b)
    wih0_ref : (I, 4H)           layer-0 input weight, gate order (i|f|g|o)
    wbig_ref : (L, H, L*4H)      block-banded recurrent weight:
                                 wbig[l][:, l*4H:(l+1)*4H]     = W_hh_l.T
                                 wbig[l][:, (l+1)*4H:(l+2)*4H] = W_ih_{l+1}.T
    bias_ref : (L, 1, 4H)        b_ih + b_hh per layer, gate-concatenated
    h0_ref   : (L, BP, H)        initial hidden state (batch padded to BP)
    c0_ref   : (L, BP, H)        initial cell state
    wout_ref : (H, O)            output Linear weight (transposed)
    bout_ref : (1, O)            output Linear bias
    out_ref  : (T*BP, O)         log_softmax(logits)
    hn_ref   : (L, BP, H)        final hidden state
    cn_ref   : (L, BP, H)        final cell state
    """
    H4 = 4 * H

    # Bulk layer-0 input projection (+ fused bias): one matmul, off the
    # recurrent critical path, kept as a value (no scratch round-trip).
    xp = jnp.dot(x_ref[...], wih0_ref[...],
                 preferred_element_type=jnp.float32) + bias_ref[0]     # (T*BP, 4H)

    # Hoist loop-invariant weights / biases out of the recurrence.
    wrows = [wbig_ref[l] for l in range(L)]          # each (H, L*4H)
    biases = [bias_ref[l] for l in range(L)]         # each (1, 4H)

    h = [h0_ref[l] for l in range(L)]                # each (BP, H)
    c = [c0_ref[l] for l in range(L)]
    seq_rows = [None] * T                            # last layer's h per timestep

    # Wavefront over time: at step s, layer l advances time t = s - l.
    # TODO(synk): switch the fully-unrolled Python loop to lax.fori_loop with a
    # modest unroll factor if T ever grows well beyond ~32.
    for s in range(T + L - 1):
        # All recurrent matmuls of this wavefront step are independent and sit at
        # the top of the step: block-row l contributes W_hh_l to layer l's gates
        # and W_ih_{l+1} to layer (l+1)'s gates (256 output lanes for L=2, H=32).
        rec = jnp.dot(h[0], wrows[0], preferred_element_type=jnp.float32)
        for l in range(1, L):
            rec = rec + jnp.dot(h[l], wrows[l], preferred_element_type=jnp.float32)

        for l in range(L):
            t = s - l
            if t < 0 or t >= T:
                continue                              # layer inactive at this step
            gates = rec[:, l * H4:(l + 1) * H4]       # (BP, 4H), 128-lane-aligned
            gates = gates + (xp[t * BP:(t + 1) * BP] if l == 0 else biases[l])
            # Full-width activations: 2 EUP passes over the whole gate vector,
            # gate selection afterwards via free static lane slices.
            sg = jax.nn.sigmoid(gates)
            th = jnp.tanh(gates)
            i_g = sg[:, 0 * H:1 * H]
            f_g = sg[:, 1 * H:2 * H]
            g_g = th[:, 2 * H:3 * H]
            o_g = sg[:, 3 * H:4 * H]
            c_new = f_g * c[l] + i_g * g_g
            h_new = o_g * jnp.tanh(c_new)
            c[l] = c_new
            h[l] = h_new
            if l == L - 1:
                seq_rows[t] = h_new                   # kept as a value for the head

    for l in range(L):
        hn_ref[l] = h[l]
        cn_ref[l] = c[l]

    # Fused output head once for the whole sequence: Linear + log_softmax,
    # single bulk matmul and a single store.
    # TODO(synk): if output_size grows, pad wout/out to a lane multiple of 128 and
    # mask the softmax reduction so the writeback is an unmasked dense vst.
    seq = jnp.concatenate(seq_rows, axis=0)           # (T*BP, H), sublane concat
    logits = jnp.dot(seq, wout_ref[...],
                     preferred_element_type=jnp.float32) + bout_ref[...]
    m = jnp.max(logits, axis=-1, keepdims=True)
    z = logits - m
    lse = jnp.log(jnp.sum(jnp.exp(z), axis=-1, keepdims=True))
    out_ref[...] = (z - lse).astype(out_ref.dtype)


def network_forward(x_bti, h0, c0, wih0, wbig, bias, wout, bout):
    """Wrapper: PyTorch batch_first (B,T,I) in, ((B,T,O), (h_n, c_n)) out."""
    B, T, I = x_bti.shape
    L, _, H = h0.shape
    O = wout.shape[1]

    BP = ((B + 7) // 8) * 8            # pad batch to the f32 sublane tile
    pad = BP - B

    x_tbi = jnp.transpose(x_bti, (1, 0, 2))                          # (T, B, I)
    x_flat = jnp.pad(x_tbi, ((0, 0), (0, pad), (0, 0))).reshape(T * BP, I)
    h0p = jnp.pad(h0, ((0, 0), (0, pad), (0, 0)))
    c0p = jnp.pad(c0, ((0, 0), (0, pad), (0, 0)))

    def vmem():
        return pl.BlockSpec(memory_space=pltpu.MemorySpace.VMEM)

    kernel = functools.partial(_lstm_head_kernel, T=T, BP=BP, L=L, H=H)

    out_flat, hn, cn = pl.pallas_call(
        kernel,
        out_shape=(jax.ShapeDtypeStruct((T * BP, O), jnp.float32),
                   jax.ShapeDtypeStruct((L, BP, H), jnp.float32),
                   jax.ShapeDtypeStruct((L, BP, H), jnp.float32)),
        in_specs=[vmem() for _ in range(8)],
        out_specs=(vmem(), vmem(), vmem()),
    )(x_flat, wih0, wbig, bias, h0p, c0p, wout, bout)

    out = jnp.transpose(out_flat.reshape(T, BP, O)[:, :B], (1, 0, 2))  # (B, T, O)
    return out, (hn[:, :B], cn[:, :B])


def pack_params(lstm_params, W_out, b_out, *, H, L):
    """PyTorch-convention params -> kernel-format right-multiply packed weights."""
    H4 = 4 * H
    wih0 = jnp.asarray(lstm_params[0][0]).T                            # (I, 4H)
    wbig = np.zeros((L, H, L * H4), np.float32)
    for l in range(L):
        wbig[l, :, l * H4:(l + 1) * H4] = np.asarray(lstm_params[l][1]).T       # W_hh_l.T
        if l + 1 < L:
            wbig[l, :, (l + 1) * H4:(l + 2) * H4] = np.asarray(lstm_params[l + 1][0]).T  # W_ih_{l+1}.T
    bias = jnp.stack([(p[2] + p[3]).reshape(1, H4) for p in lstm_params])        # (L,1,4H)
    wout = jnp.asarray(W_out).T                                        # (H, O)
    bout = jnp.asarray(b_out).reshape(1, -1)                           # (1, O)
    return wih0, jnp.asarray(wbig), bias, wout, bout


def reference_forward(x_bti, h0, c0, lstm_params, W_out, b_out):
    """Pure-JAX reference with PyTorch nn.LSTM semantics (gate order i,f,g,o)."""
    B, T, _ = x_bti.shape
    L = h0.shape[0]
    layer_in = x_bti
    hs, cs = [], []
    for l in range(L):
        W_ih, W_hh, b_ih, b_hh = lstm_params[l]
        h, c = h0[l], c0[l]
        outs = []
        for t in range(T):
            gates = layer_in[:, t] @ W_ih.T + h @ W_hh.T + b_ih + b_hh
            i, f, g, o = jnp.split(gates, 4, axis=-1)
            i = jax.nn.sigmoid(i)
            f = jax.nn.sigmoid(f)
            g = jnp.tanh(g)
            o = jax.nn.sigmoid(o)
            c = f * c + i * g
            h = o * jnp.tanh(c)
            outs.append(h)
        layer_in = jnp.stack(outs, axis=1)
        hs.append(h)
        cs.append(c)
    logits = layer_in @ W_out.T + b_out
    return jax.nn.log_softmax(logits, axis=-1), (jnp.stack(hs), jnp.stack(cs))


if __name__ == "__main__":
    # Small shapes consistent with the module's forward.
    B, T = 2, 8                      # batch, sequence length
    I, H, O, L = 4, 32, 8, 2         # input_size, hidden_size, output_size, num_layers

    key = jax.random.PRNGKey(0)
    bound = 1.0 / np.sqrt(H)
    keys = iter(jax.random.split(key, 4 * L + 2 + 3))

    def uniform(k, shape):
        return jax.random.uniform(k, shape, dtype=jnp.float32,
                                  minval=-bound, maxval=bound)

    # Deterministic parameter init (PyTorch shapes: W_ih (4H,in), W_hh (4H,H), biases (4H,))
    lstm_params = []
    for l in range(L):
        in_dim = I if l == 0 else H
        W_ih = uniform(next(keys), (4 * H, in_dim))
        W_hh = uniform(next(keys), (4 * H, H))
        b_ih = uniform(next(keys), (4 * H,))
        b_hh = uniform(next(keys), (4 * H,))
        lstm_params.append((W_ih, W_hh, b_ih, b_hh))
    W_out = uniform(next(keys), (O, H))
    b_out = uniform(next(keys), (O,))

    # Inputs: x (batch_first) and initial state (h0, c0) as in PyTorch.
    x = jax.random.normal(next(keys), (B, T, I), dtype=jnp.float32)
    h0 = jax.random.normal(next(keys), (L, B, H), dtype=jnp.float32)
    c0 = jnp.zeros((L, B, H), dtype=jnp.float32)

    # Kernel-format packed parameters.
    wih0, wbig, bias, wout, bout = pack_params(lstm_params, W_out, b_out, H=H, L=L)

    # Run the Pallas kernel.
    out, (hn, cn) = network_forward(x, h0, c0, wih0, wbig, bias, wout, bout)
    jax.block_until_ready((out, hn, cn))

    # Correctness check against a pure-JAX reference.
    ref_out, (ref_hn, ref_cn) = reference_forward(x, h0, c0, lstm_params, W_out, b_out)
    np.testing.assert_allclose(np.asarray(out), np.asarray(ref_out), atol=1e-4, rtol=1e-4)
    np.testing.assert_allclose(np.asarray(hn), np.asarray(ref_hn), atol=1e-4, rtol=1e-4)
    np.testing.assert_allclose(np.asarray(cn), np.asarray(ref_cn), atol=1e-4, rtol=1e-4)

    print("KERNEL_OK")
</pallas_src>

<mosaic_0001>
module attributes {stable_mosaic.version = 11 : i64} {
  func.func @_lstm_head_kernel(%arg0: memref<64x4xf32, #tpu.memory_space<vmem>>, %arg1: memref<4x128xf32, #tpu.memory_space<vmem>>, %arg2: memref<2x32x256xf32, #tpu.memory_space<vmem>>, %arg3: memref<2x1x128xf32, #tpu.memory_space<vmem>>, %arg4: memref<2x8x32xf32, #tpu.memory_space<vmem>>, %arg5: memref<2x8x32xf32, #tpu.memory_space<vmem>>, %arg6: memref<32x8xf32, #tpu.memory_space<vmem>>, %arg7: memref<1x8xf32, #tpu.memory_space<vmem>>, %arg8: memref<64x8xf32, #tpu.memory_space<vmem>>, %arg9: memref<2x8x32xf32, #tpu.memory_space<vmem>>, %arg10: memref<2x8x32xf32, #tpu.memory_space<vmem>>) attributes {dimension_semantics = [], scalar_prefetch = 0 : i64, scratch_operands = 0 : i64, tpu.core_type = #tpu.core_type<tc>} {
    %c0 = arith.constant 0 : index
    %c0_0 = arith.constant 0 : index
    %0 = vector.load %arg0[%c0, %c0_0] : memref<64x4xf32, #tpu.memory_space<vmem>>, vector<64x4xf32>
    %c0_1 = arith.constant 0 : index
    %c0_2 = arith.constant 0 : index
    %1 = vector.load %arg1[%c0_1, %c0_2] : memref<4x128xf32, #tpu.memory_space<vmem>>, vector<4x128xf32>
    %cst = arith.constant dense<0.000000e+00> : vector<64x128xf32>
    %2 = tpu.matmul %0, %1, %cst {dimension_numbers = #tpu.dot_dimension_numbers<[1], [0], [0], [1], [0, 0, 1, 1], [], []>} : vector<64x4xf32>, vector<4x128xf32>, vector<64x128xf32> -> vector<64x128xf32>
    %c0_3 = arith.constant 0 : index
    %c0_4 = arith.constant 0 : index
    %c0_5 = arith.constant 0 : index
    %3 = vector.load %arg3[%c0_3, %c0_4, %c0_5] : memref<2x1x128xf32, #tpu.memory_space<vmem>>, vector<1x1x128xf32>
    %4 = vector.shape_cast %3 : vector<1x1x128xf32> to vector<1x128xf32>
    %5 = vector.broadcast %4 : vector<1x128xf32> to vector<64x128xf32>
    %6 = arith.addf %2, %5 : vector<64x128xf32>
    %c0_6 = arith.constant 0 : index
    %c0_7 = arith.constant 0 : index
    %c0_8 = arith.constant 0 : index
    %7 = vector.load %arg2[%c0_6, %c0_7, %c0_8] : memref<2x32x256xf32, #tpu.memory_space<vmem>>, vector<1x32x256xf32>
    %8 = vector.shape_cast %7 : vector<1x32x256xf32> to vector<32x256xf32>
    %c1 = arith.constant 1 : index
    %c0_9 = arith.constant 0 : index
    %c0_10 = arith.constant 0 : index
    %9 = vector.load %arg2[%c1, %c0_9, %c0_10] : memref<2x32x256xf32, #tpu.memory_space<vmem>>, vector<1x32x256xf32>
    %10 = vector.shape_cast %9 : vector<1x32x256xf32> to vector<32x256xf32>
    %c1_11 = arith.constant 1 : index
    %c0_12 = arith.constant 0 : index
    %c0_13 = arith.constant 0 : index
    %11 = vector.load %arg3[%c1_11, %c0_12, %c0_13] : memref<2x1x128xf32, #tpu.memory_space<vmem>>, vector<1x1x128xf32>
    %12 = vector.shape_cast %11 : vector<1x1x128xf32> to vector<1x128xf32>
    %c0_14 = arith.constant 0 : index
    %c0_15 = arith.constant 0 : index
    %c0_16 = arith.constant 0 : index
    %13 = vector.load %arg4[%c0_14, %c0_15, %c0_16] : memref<2x8x32xf32, #tpu.memory_space<vmem>>, vector<1x8x32xf32>
    %14 = vector.shape_cast %13 : vector<1x8x32xf32> to vector<8x32xf32>
    %c1_17 = arith.constant 1 : index
    %c0_18 = arith.constant 0 : index
    %c0_19 = arith.constant 0 : index
    %15 = vector.load %arg4[%c1_17, %c0_18, %c0_19] : memref<2x8x32xf32, #tpu.memory_space<vmem>>, vector<1x8x32xf32>
    %16 = vector.shape_cast %15 : vector<1x8x32xf32> to vector<8x32xf32>
    %c0_20 = arith.constant 0 : index
    %c0_21 = arith.constant 0 : index
    %c0_22 = arith.constant 0 : index
    %17 = vector.load %arg5[%c0_20, %c0_21, %c0_22] : memref<2x8x32xf32, #tpu.memory_space<vmem>>, vector<1x8x32xf32>
    %18 = vector.shape_cast %17 : vector<1x8x32xf32> to vector<8x32xf32>
    %c1_23 = arith.constant 1 : index
    %c0_24 = arith.constant 0 : index
    %c0_25 = arith.constant 0 : index
    %19 = vector.load %arg5[%c1_23, %c0_24, %c0_25] : memref<2x8x32xf32, #tpu.memory_space<vmem>>, vector<1x8x32xf32>
    %20 = vector.shape_cast %19 : vector<1x8x32xf32> to vector<8x32xf32>
    %cst_26 = arith.constant dense<0.000000e+00> : vector<8x256xf32>
    %21 = tpu.matmul %14, %8, %cst_26 {dimension_numbers = #tpu.dot_dimension_numbers<[1], [0], [0], [1], [0, 0, 1, 1], [], []>} : vector<8x32xf32>, vector<32x256xf32>, vector<8x256xf32> -> vector<8x256xf32>
    %cst_27 = arith.constant dense<0.000000e+00> : vector<8x256xf32>
    %22 = tpu.matmul %16, %10, %cst_27 {dimension_numbers = #tpu.dot_dimension_numbers<[1], [0], [0], [1], [0, 0, 1, 1], [], []>} : vector<8x32xf32>, vector<32x256xf32>, vector<8x256xf32> -> vector<8x256xf32>
    %23 = arith.addf %21, %22 : vector<8x256xf32>
    %24 = vector.extract_strided_slice %23 {offsets = [0, 0], sizes = [8, 128], strides = [1, 1]} : vector<8x256xf32> to vector<8x128xf32>
    %25 = vector.extract_strided_slice %6 {offsets = [0, 0], sizes = [8, 128], strides = [1, 1]} : vector<64x128xf32> to vector<8x128xf32>
    %26 = arith.addf %24, %25 : vector<8x128xf32>
    %27 = arith.negf %26 : vector<8x128xf32>
    %28 = math.exp %27 : vector<8x128xf32>
    %cst_28 = arith.constant 1.000000e+00 : f32
    %29 = vector.broadcast %cst_28 : f32 to vector<8x128xf32>
    %30 = arith.addf %29, %28 : vector<8x128xf32>
    %31 = arith.divf %29, %30 : vector<8x128xf32>
    %32 = math.tanh %26 : vector<8x128xf32>
    %33 = vector.extract_strided_slice %31 {offsets = [0, 0], sizes = [8, 32], strides = [1, 1]} : vector<8x128xf32> to vector<8x32xf32>
    %34 = vector.extract_strided_slice %31 {offsets = [0, 32], sizes = [8, 32], strides = [1, 1]} : vector<8x128xf32> to vector<8x32xf32>
    %35 = vector.extract_strided_slice %32 {offsets = [0, 64], sizes = [8, 32], strides = [1, 1]} : vector<8x128xf32> to vector<8x32xf32>
    %36 = vector.extract_strided_slice %31 {offsets = [0, 96], sizes = [8, 32], strides = [1, 1]} : vector<8x128xf32> to vector<8x32xf32>
    %37 = arith.mulf %34, %18 : vector<8x32xf32>
    %38 = arith.mulf %33, %35 : vector<8x32xf32>
    %39 = arith.addf %37, %38 : vector<8x32xf32>
    %40 = math.tanh %39 : vector<8x32xf32>
    %41 = arith.mulf %36, %40 : vector<8x32xf32>
    %cst_29 = arith.constant dense<0.000000e+00> : vector<8x256xf32>
    %42 = tpu.matmul %41, %8, %cst_29 {dimension_numbers = #tpu.dot_dimension_numbers<[1], [0], [0], [1], [0, 0, 1, 1], [], []>} : vector<8x32xf32>, vector<32x256xf32>, vector<8x256xf32> -> vector<8x256xf32>
    %cst_30 = arith.constant dense<0.000000e+00> : vector<8x256xf32>
    %43 = tpu.matmul %16, %10, %cst_30 {dimension_numbers = #tpu.dot_dimension_numbers<[1], [0], [0], [1], [0, 0, 1, 1], [], []>} : vector<8x32xf32>, vector<32x256xf32>, vector<8x256xf32> -> vector<8x256xf32>
    %44 = arith.addf %42, %43 : vector<8x256xf32>
    %45 = vector.extract_strided_slice %44 {offsets = [0, 0], sizes = [8, 128], strides = [1, 1]} : vector<8x256xf32> to vector<8x128xf32>
    %46 = vector.extract_strided_slice %6 {offsets = [8, 0], sizes = [8, 128], strides = [1, 1]} : vector<64x128xf32> to vector<8x128xf32>
    %47 = arith.addf %45, %46 : vector<8x128xf32>
    %48 = arith.negf %47 : vector<8x128xf32>
    %49 = math.exp %48 : vector<8x128xf32>
    %cst_31 = arith.constant 1.000000e+00 : f32
    %50 = vector.broadcast %cst_31 : f32 to vector<8x128xf32>
    %51 = arith.addf %50, %49 : vector<8x128xf32>
    %52 = arith.divf %50, %51 : vector<8x128xf32>
    %53 = math.tanh %47 : vector<8x128xf32>
    %54 = vector.extract_strided_slice %52 {offsets = [0, 0], sizes = [8, 32], strides = [1, 1]} : vector<8x128xf32> to vector<8x32xf32>
    %55 = vector.extract_strided_slice %52 {offsets = [0, 32], sizes = [8, 32], strides = [1, 1]} : vector<8x128xf32> to vector<8x32xf32>
    %56 = vector.extract_strided_slice %53 {offsets = [0, 64], sizes = [8, 32], strides = [1, 1]} : vector<8x128xf32> to vector<8x32xf32>
    %57 = vector.extract_strided_slice %52 {offsets = [0, 96], sizes = [8, 32], strides = [1, 1]} : vector<8x128xf32> to vector<8x32xf32>
    %58 = arith.mulf %55, %39 : vector<8x32xf32>
    %59 = arith.mulf %54, %56 : vector<8x32xf32>
    %60 = arith.addf %58, %59 : vector<8x32xf32>
    %61 = math.tanh %60 : vector<8x32xf32>
    %62 = arith.mulf %57, %61 : vector<8x32xf32>
    %63 = vector.extract_strided_slice %44 {offsets = [0, 128], sizes = [8, 128], strides = [1, 1]} : vector<8x256xf32> to vector<8x128xf32>
    %64 = vector.broadcast %12 : vector<1x128xf32> to vector<8x128xf32>
    %65 = arith.addf %63, %64 : vector<8x128xf32>
    %66 = arith.negf %65 : vector<8x128xf32>
    %67 = math.exp %66 : vector<8x128xf32>
    %cst_32 = arith.constant 1.000000e+00 : f32
    %68 = vector.broadcast %cst_32 : f32 to vector<8x128xf32>
    %69 = arith.addf %68, %67 : vector<8x128xf32>
    %70 = arith.divf %68, %69 : vector<8x128xf32>
    %71 = math.tanh %65 : vector<8x128xf32>
    %72 = vector.extract_strided_slice %70 {offsets = [0, 0], sizes = [8, 32], strides = [1, 1]} : vector<8x128xf32> to vector<8x32xf32>
    %73 = vector.extract_strided_slice %70 {offsets = [0, 32], sizes = [8, 32], strides = [1, 1]} : vector<8x128xf32> to vector<8x32xf32>
    %74 = vector.extract_strided_slice %71 {offsets = [0, 64], sizes = [8, 32], strides = [1, 1]} : vector<8x128xf32> to vector<8x32xf32>
    %75 = vector.extract_strided_slice %70 {offsets = [0, 96], sizes = [8, 32], strides = [1, 1]} : vector<8x128xf32> to vector<8x32xf32>
    %76 = arith.mulf %73, %20 : vector<8x32xf32>
    %77 = arith.mulf %72, %74 : vector<8x32xf32>
    %78 = arith.addf %76, %77 : vector<8x32xf32>
    %79 = math.tanh %78 : vector<8x32xf32>
    %80 = arith.mulf %75, %79 : vector<8x32xf32>
    %cst_33 = arith.constant dense<0.000000e+00> : vector<8x256xf32>
    %81 = tpu.matmul %62, %8, %cst_33 {dimension_numbers = #tpu.dot_dimension_numbers<[1], [0], [0], [1], [0, 0, 1, 1], [], []>} : vector<8x32xf32>, vector<32x256xf32>, vector<8x256xf32> -> vector<8x256xf32>
    %cst_34 = arith.constant dense<0.000000e+00> : vector<8x256xf32>
    %82 = tpu.matmul %80, %10, %cst_34 {dimension_numbers = #tpu.dot_dimension_numbers<[1], [0], [0], [1], [0, 0, 1, 1], [], []>} : vector<8x32xf32>, vector<32x256xf32>, vector<8x256xf32> -> vector<8x256xf32>
    %83 = arith.addf %81, %82 : vector<8x256xf32>
    %84 = vector.extract_strided_slice %83 {offsets = [0, 0], sizes = [8, 128], strides = [1, 1]} : vector<8x256xf32> to vector<8x128xf32>
    %85 = vector.extract_strided_slice %6 {offsets = [16, 0], sizes = [8, 128], strides = [1, 1]} : vector<64x128xf32> to vector<8x128xf32>
    %86 = arith.addf %84, %85 : vector<8x128xf32>
    %87 = arith.negf %86 : vector<8x128xf32>
    %88 = math.exp %87 : vector<8x128xf32>
    %cst_35 = arith.constant 1.000000e+00 : f32
    %89 = vector.broadcast %cst_35 : f32 to vector<8x128xf32>
    %90 = arith.addf %89, %88 : vector<8x128xf32>
    %91 = arith.divf %89, %90 : vector<8x128xf32>
    %92 = math.tanh %86 : vector<8x128xf32>
    %93 = vector.extract_strided_slice %91 {offsets = [0, 0], sizes = [8, 32], strides = [1, 1]} : vector<8x128xf32> to vector<8x32xf32>
    %94 = vector.extract_strided_slice %91 {offsets = [0, 32], sizes = [8, 32], strides = [1, 1]} : vector<8x128xf32> to vector<8x32xf32>
    %95 = vector.extract_strided_slice %92 {offsets = [0, 64], sizes = [8, 32], strides = [1, 1]} : vector<8x128xf32> to vector<8x32xf32>
    %96 = vector.extract_strided_slice %91 {offsets = [0, 96], sizes = [8, 32], strides = [1, 1]} : vector<8x128xf32> to vector<8x32xf32>
    %97 = arith.mulf %94, %60 : vector<8x32xf32>
    %98 = arith.mulf %93, %95 : vector<8x32xf32>
    %99 = arith.addf %97, %98 : vector<8x32xf32>
    %100 = math.tanh %99 : vector<8x32xf32>
    %101 = arith.mulf %96, %100 : vector<8x32xf32>
    %102 = vector.extract_strided_slice %83 {offsets = [0, 128], sizes = [8, 128], strides = [1, 1]} : vector<8x256xf32> to vector<8x128xf32>
    %103 = vector.broadcast %12 : vector<1x128xf32> to vector<8x128xf32>
    %104 = arith.addf %102, %103 : vector<8x128xf32>
    %105 = arith.negf %104 : vector<8x128xf32>
    %106 = math.exp %105 : vector<8x128xf32>
    %cst_36 = arith.constant 1.000000e+00 : f32
    %107 = vector.broadcast %cst_36 : f32 to vector<8x128xf32>
    %108 = arith.addf %107, %106 : vector<8x128xf32>
    %109 = arith.divf %107, %108 : vector<8x128xf32>
    %110 = math.tanh %104 : vector<8x128xf32>
    %111 = vector.extract_strided_slice %109 {offsets = [0, 0], sizes = [8, 32], strides = [1, 1]} : vector<8x128xf32> to vector<8x32xf32>
    %112 = vector.extract_strided_slice %109 {offsets = [0, 32], sizes = [8, 32], strides = [1, 1]} : vector<8x128xf32> to vector<8x32xf32>
    %113 = vector.extract_strided_slice %110 {offsets = [0, 64], sizes = [8, 32], strides = [1, 1]} : vector<8x128xf32> to vector<8x32xf32>
    %114 = vector.extract_strided_slice %109 {offsets = [0, 96], sizes = [8, 32], strides = [1, 1]} : vector<8x128xf32> to vector<8x32xf32>
    %115 = arith.mulf %112, %78 : vector<8x32xf32>
    %116 = arith.mulf %111, %113 : vector<8x32xf32>
    %117 = arith.addf %115, %116 : vector<8x32xf32>
    %118 = math.tanh %117 : vector<8x32xf32>
    %119 = arith.mulf %114, %118 : vector<8x32xf32>
    %cst_37 = arith.constant dense<0.000000e+00> : vector<8x256xf32>
    %120 = tpu.matmul %101, %8, %cst_37 {dimension_numbers = #tpu.dot_dimension_numbers<[1], [0], [0], [1], [0, 0, 1, 1], [], []>} : vector<8x32xf32>, vector<32x256xf32>, vector<8x256xf32> -> vector<8x256xf32>
    %cst_38 = arith.constant dense<0.000000e+00> : vector<8x256xf32>
    %121 = tpu.matmul %119, %10, %cst_38 {dimension_numbers = #tpu.dot_dimension_numbers<[1], [0], [0], [1], [0, 0, 1, 1], [], []>} : vector<8x32xf32>, vector<32x256xf32>, vector<8x256xf32> -> vector<8x256xf32>
    %122 = arith.addf %120, %121 : vector<8x256xf32>
    %123 = vector.extract_strided_slice %122 {offsets = [0, 0], sizes = [8, 128], strides = [1, 1]} : vector<8x256xf32> to vector<8x128xf32>
    %124 = vector.extract_strided_slice %6 {offsets = [24, 0], sizes = [8, 128], strides = [1, 1]} : vector<64x128xf32> to vector<8x128xf32>
    %125 = arith.addf %123, %124 : vector<8x128xf32>
    %126 = arith.negf %125 : vector<8x128xf32>
    %127 = math.exp %126 : vector<8x128xf32>
    %cst_39 = arith.constant 1.000000e+00 : f32
    %128 = vector.broadcast %cst_39 : f32 to vector<8x128xf32>
    %129 = arith.addf %128, %127 : vector<8x128xf32>
    %130 = arith.divf %128, %129 : vector<8x128xf32>
    %131 = math.tanh %125 : vector<8x128xf32>
    %132 = vector.extract_strided_slice %130 {offsets = [0, 0], sizes = [8, 32], strides = [1, 1]} : vector<8x128xf32> to vector<8x32xf32>
    %133 = vector.extract_strided_slice %130 {offsets = [0, 32], sizes = [8, 32], strides = [1, 1]} : vector<8x128xf32> to vector<8x32xf32>
    %134 = vector.extract_strided_slice %131 {offsets = [0, 64], sizes = [8, 32], strides = [1, 1]} : vector<8x128xf32> to vector<8x32xf32>
    %135 = vector.extract_strided_slice %130 {offsets = [0, 96], sizes = [8, 32], strides = [1, 1]} : vector<8x128xf32> to vector<8x32xf32>
    %136 = arith.mulf %133, %99 : vector<8x32xf32>
    %137 = arith.mulf %132, %134 : vector<8x32xf32>
    %138 = arith.addf %136, %137 : vector<8x32xf32>
    %139 = math.tanh %138 : vector<8x32xf32>
    %140 = arith.mulf %135, %139 : vector<8x32xf32>
    %141 = vector.extract_strided_slice %122 {offsets = [0, 128], sizes = [8, 128], strides = [1, 1]} : vector<8x256xf32> to vector<8x128xf32>
    %142 = vector.broadcast %12 : vector<1x128xf32> to vector<8x128xf32>
    %143 = arith.addf %141, %142 : vector<8x128xf32>
    %144 = arith.negf %143 : vector<8x128xf32>
    %145 = math.exp %144 : vector<8x128xf32>
    %cst_40 = arith.constant 1.000000e+00 : f32
    %146 = vector.broadcast %cst_40 : f32 to vector<8x128xf32>
    %147 = arith.addf %146, %145 : vector<8x128xf32>
    %148 = arith.divf %146, %147 : vector<8x128xf32>
    %149 = math.tanh %143 : vector<8x128xf32>
    %150 = vector.extract_strided_slice %148 {offsets = [0, 0], sizes = [8, 32], strides = [1, 1]} : vector<8x128xf32> to vector<8x32xf32>
    %151 = vector.extract_strided_slice %148 {offsets = [0, 32], sizes = [8, 32], strides = [1, 1]} : vector<8x128xf32> to vector<8x32xf32>
    %152 = vector.extract_strided_slice %149 {offsets = [0, 64], sizes = [8, 32], strides = [1, 1]} : vector<8x128xf32> to vector<8x32xf32>
    %153 = vector.extract_strided_slice %148 {offsets = [0, 96], sizes = [8, 32], strides = [1, 1]} : vector<8x128xf32> to vector<8x32xf32>
    %154 = arith.mulf %151, %117 : vector<8x32xf32>
    %155 = arith.mulf %150, %152 : vector<8x32xf32>
    %156 = arith.addf %154, %155 : vector<8x32xf32>
    %157 = math.tanh %156 : vector<8x32xf32>
    %158 = arith.mulf %153, %157 : vector<8x32xf32>
    %cst_41 = arith.constant dense<0.000000e+00> : vector<8x256xf32>
    %159 = tpu.matmul %140, %8, %cst_41 {dimension_numbers = #tpu.dot_dimension_numbers<[1], [0], [0], [1], [0, 0, 1, 1], [], []>} : vector<8x32xf32>, vector<32x256xf32>, vector<8x256xf32> -> vector<8x256xf32>
    %cst_42 = arith.constant dense<0.000000e+00> : vector<8x256xf32>
    %160 = tpu.matmul %158, %10, %cst_42 {dimension_numbers = #tpu.dot_dimension_numbers<[1], [0], [0], [1], [0, 0, 1, 1], [], []>} : vector<8x32xf32>, vector<32x256xf32>, vector<8x256xf32> -> vector<8x256xf32>
    %161 = arith.addf %159, %160 : vector<8x256xf32>
    %162 = vector.extract_strided_slice %161 {offsets = [0, 0], sizes = [8, 128], strides = [1, 1]} : vector<8x256xf32> to vector<8x128xf32>
    %163 = vector.extract_strided_slice %6 {offsets = [32, 0], sizes = [8, 128], strides = [1, 1]} : vector<64x128xf32> to vector<8x128xf32>
    %164 = arith.addf %162, %163 : vector<8x128xf32>
    %165 = arith.negf %164 : vector<8x128xf32>
    %166 = math.exp %165 : vector<8x128xf32>
    %cst_43 = arith.constant 1.000000e+00 : f32
    %167 = vector.broadcast %cst_43 : f32 to vector<8x128xf32>
    %168 = arith.addf %167, %166 : vector<8x128xf32>
    %169 = arith.divf %167, %168 : vector<8x128xf32>
    %170 = math.tanh %164 : vector<8x128xf32>
    %171 = vector.extract_strided_slice %169 {offsets = [0, 0], sizes = [8, 32], strides = [1, 1]} : vector<8x128xf32> to vector<8x32xf32>
    %172 = vector.extract_strided_slice %169 {offsets = [0, 32], sizes = [8, 32], strides = [1, 1]} : vector<8x128xf32> to vector<8x32xf32>
    %173 = vector.extract_strided_slice %170 {offsets = [0, 64], sizes = [8, 32], strides = [1, 1]} : vector<8x128xf32> to vector<8x32xf32>
    %174 = vector.extract_strided_slice %169 {offsets = [0, 96], sizes = [8, 32], strides = [1, 1]} : vector<8x128xf32> to vector<8x32xf32>
    %175 = arith.mulf %172, %138 : vector<8x32xf32>
    %176 = arith.mulf %171, %173 : vector<8x32xf32>
    %177 = arith.addf %175, %176 : vector<8x32xf32>
    %178 = math.tanh %177 : vector<8x32xf32>
    %179 = arith.mulf %174, %178 : vector<8x32xf32>
    %180 = vector.extract_strided_slice %161 {offsets = [0, 128], sizes = [8, 128], strides = [1, 1]} : vector<8x256xf32> to vector<8x128xf32>
    %181 = vector.broadcast %12 : vector<1x128xf32> to vector<8x128xf32>
    %182 = arith.addf %180, %181 : vector<8x128xf32>
    %183 = arith.negf %182 : vector<8x128xf32>
    %184 = math.exp %183 : vector<8x128xf32>
    %cst_44 = arith.constant 1.000000e+00 : f32
    %185 = vector.broadcast %cst_44 : f32 to vector<8x128xf32>
    %186 = arith.addf %185, %184 : vector<8x128xf32>
    %187 = arith.divf %185, %186 : vector<8x128xf32>
    %188 = math.tanh %182 : vector<8x128xf32>
    %189 = vector.extract_strided_slice %187 {offsets = [0, 0], sizes = [8, 32], strides = [1, 1]} : vector<8x128xf32> to vector<8x32xf32>
    %190 = vector.extract_strided_slice %187 {offsets = [0, 32], sizes = [8, 32], strides = [1, 1]} : vector<8x128xf32> to vector<8x32xf32>
    %191 = vector.extract_strided_slice %188 {offsets = [0, 64], sizes = [8, 32], strides = [1, 1]} : vector<8x128xf32> to vector<8x32xf32>
    %192 = vector.extract_strided_slice %187 {offsets = [0, 96], sizes = [8, 32], strides = [1, 1]} : vector<8x128xf32> to vector<8x32xf32>
    %193 = arith.mulf %190, %156 : vector<8x32xf32>
    %194 = arith.mulf %189, %191 : vector<8x32xf32>
    %195 = arith.addf %193, %194 : vector<8x32xf32>
    %196 = math.tanh %195 : vector<8x32xf32>
    %197 = arith.mulf %192, %196 : vector<8x32xf32>
    %cst_45 = arith.constant dense<0.000000e+00> : vector<8x256xf32>
    %198 = tpu.matmul %179, %8, %cst_45 {dimension_numbers = #tpu.dot_dimension_numbers<[1], [0], [0], [1], [0, 0, 1, 1], [], []>} : vector<8x32xf32>, vector<32x256xf32>, vector<8x256xf32> -> vector<8x256xf32>
    %cst_46 = arith.constant dense<0.000000e+00> : vector<8x256xf32>
    %199 = tpu.matmul %197, %10, %cst_46 {dimension_numbers = #tpu.dot_dimension_numbers<[1], [0], [0], [1], [0, 0, 1, 1], [], []>} : vector<8x32xf32>, vector<32x256xf32>, vector<8x256xf32> -> vector<8x256xf32>
    %200 = arith.addf %198, %199 : vector<8x256xf32>
    %201 = vector.extract_strided_slice %200 {offsets = [0, 0], sizes = [8, 128], strides = [1, 1]} : vector<8x256xf32> to vector<8x128xf32>
    %202 = vector.extract_strided_slice %6 {offsets = [40, 0], sizes = [8, 128], strides = [1, 1]} : vector<64x128xf32> to vector<8x128xf32>
    %203 = arith.addf %201, %202 : vector<8x128xf32>
    %204 = arith.negf %203 : vector<8x128xf32>
    %205 = math.exp %204 : vector<8x128xf32>
    %cst_47 = arith.constant 1.000000e+00 : f32
    %206 = vector.broadcast %cst_47 : f32 to vector<8x128xf32>
    %207 = arith.addf %206, %205 : vector<8x128xf32>
    %208 = arith.divf %206, %207 : vector<8x128xf32>
    %209 = math.tanh %203 : vector<8x128xf32>
    %210 = vector.extract_strided_slice %208 {offsets = [0, 0], sizes = [8, 32], strides = [1, 1]} : vector<8x128xf32> to vector<8x32xf32>
    %211 = vector.extract_strided_slice %208 {offsets = [0, 32], sizes = [8, 32], strides = [1, 1]} : vector<8x128xf32> to vector<8x32xf32>
    %212 = vector.extract_strided_slice %209 {offsets = [0, 64], sizes = [8, 32], strides = [1, 1]} : vector<8x128xf32> to vector<8x32xf32>
    %213 = vector.extract_strided_slice %208 {offsets = [0, 96], sizes = [8, 32], strides = [1, 1]} : vector<8x128xf32> to vector<8x32xf32>
    %214 = arith.mulf %211, %177 : vector<8x32xf32>
    %215 = arith.mulf %210, %212 : vector<8x32xf32>
    %216 = arith.addf %214, %215 : vector<8x32xf32>
    %217 = math.tanh %216 : vector<8x32xf32>
    %218 = arith.mulf %213, %217 : vector<8x32xf32>
    %219 = vector.extract_strided_slice %200 {offsets = [0, 128], sizes = [8, 128], strides = [1, 1]} : vector<8x256xf32> to vector<8x128xf32>
    %220 = vector.broadcast %12 : vector<1x128xf32> to vector<8x128xf32>
    %221 = arith.addf %219, %220 : vector<8x128xf32>
    %222 = arith.negf %221 : vector<8x128xf32>
    %223 = math.exp %222 : vector<8x128xf32>
    %cst_48 = arith.constant 1.000000e+00 : f32
    %224 = vector.broadcast %cst_48 : f32 to vector<8x128xf32>
    %225 = arith.addf %224, %223 : vector<8x128xf32>
    %226 = arith.divf %224, %225 : vector<8x128xf32>
    %227 = math.tanh %221 : vector<8x128xf32>
    %228 = vector.extract_strided_slice %226 {offsets = [0, 0], sizes = [8, 32], strides = [1, 1]} : vector<8x128xf32> to vector<8x32xf32>
    %229 = vector.extract_strided_slice %226 {offsets = [0, 32], sizes = [8, 32], strides = [1, 1]} : vector<8x128xf32> to vector<8x32xf32>
    %230 = vector.extract_strided_slice %227 {offsets = [0, 64], sizes = [8, 32], strides = [1, 1]} : vector<8x128xf32> to vector<8x32xf32>
    %231 = vector.extract_strided_slice %226 {offsets = [0, 96], sizes = [8, 32], strides = [1, 1]} : vector<8x128xf32> to vector<8x32xf32>
    %232 = arith.mulf %229, %195 : vector<8x32xf32>
    %233 = arith.mulf %228, %230 : vector<8x32xf32>
    %234 = arith.addf %232, %233 : vector<8x32xf32>
    %235 = math.tanh %234 : vector<8x32xf32>
    %236 = arith.mulf %231, %235 : vector<8x32xf32>
    %cst_49 = arith.constant dense<0.000000e+00> : vector<8x256xf32>
    %237 = tpu.matmul %218, %8, %cst_49 {dimension_numbers = #tpu.dot_dimension_numbers<[1], [0], [0], [1], [0, 0, 1, 1], [], []>} : vector<8x32xf32>, vector<32x256xf32>, vector<8x256xf32> -> vector<8x256xf32>
    %cst_50 = arith.constant dense<0.000000e+00> : vector<8x256xf32>
    %238 = tpu.matmul %236, %10, %cst_50 {dimension_numbers = #tpu.dot_dimension_numbers<[1], [0], [0], [1], [0, 0, 1, 1], [], []>} : vector<8x32xf32>, vector<32x256xf32>, vector<8x256xf32> -> vector<8x256xf32>
    %239 = arith.addf %237, %238 : vector<8x256xf32>
    %240 = vector.extract_strided_slice %239 {offsets = [0, 0], sizes = [8, 128], strides = [1, 1]} : vector<8x256xf32> to vector<8x128xf32>
    %241 = vector.extract_strided_slice %6 {offsets = [48, 0], sizes = [8, 128], strides = [1, 1]} : vector<64x128xf32> to vector<8x128xf32>
    %242 = arith.addf %240, %241 : vector<8x128xf32>
    %243 = arith.negf %242 : vector<8x128xf32>
    %244 = math.exp %243 : vector<8x128xf32>
    %cst_51 = arith.constant 1.000000e+00 : f32
    %245 = vector.broadcast %cst_51 : f32 to vector<8x128xf32>
    %246 = arith.addf %245, %244 : vector<8x128xf32>
    %247 = arith.divf %245, %246 : vector<8x128xf32>
    %248 = math.tanh %242 : vector<8x128xf32>
    %249 = vector.extract_strided_slice %247 {offsets = [0, 0], sizes = [8, 32], strides = [1, 1]} : vector<8x128xf32> to vector<8x32xf32>
    %250 = vector.extract_strided_slice %247 {offsets = [0, 32], sizes = [8, 32], strides = [1, 1]} : vector<8x128xf32> to vector<8x32xf32>
    %251 = vector.extract_strided_slice %248 {offsets = [0, 64], sizes = [8, 32], strides = [1, 1]} : vector<8x128xf32> to vector<8x32xf32>
    %252 = vector.extract_strided_slice %247 {offsets = [0, 96], sizes = [8, 32], strides = [1, 1]} : vector<8x128xf32> to vector<8x32xf32>
    %253 = arith.mulf %250, %216 : vector<8x32xf32>
    %254 = arith.mulf %249, %251 : vector<8x32xf32>
    %255 = arith.addf %253, %254 : vector<8x32xf32>
    %256 = math.tanh %255 : vector<8x32xf32>
    %257 = arith.mulf %252, %256 : vector<8x32xf32>
    %258 = vector.extract_strided_slice %239 {offsets = [0, 128], sizes = [8, 128], strides = [1, 1]} : vector<8x256xf32> to vector<8x128xf32>
    %259 = vector.broadcast %12 : vector<1x128xf32> to vector<8x128xf32>
    %260 = arith.addf %258, %259 : vector<8x128xf32>
    %261 = arith.negf %260 : vector<8x128xf32>
    %262 = math.exp %261 : vector<8x128xf32>
    %cst_52 = arith.constant 1.000000e+00 : f32
    %263 = vector.broadcast %cst_52 : f32 to vector<8x128xf32>
    %264 = arith.addf %263, %262 : vector<8x128xf32>
    %265 = arith.divf %263, %264 : vector<8x128xf32>
    %266 = math.tanh %260 : vector<8x128xf32>
    %267 = vector.extract_strided_slice %265 {offsets = [0, 0], sizes = [8, 32], strides = [1, 1]} : vector<8x128xf32> to vector<8x32xf32>
    %268 = vector.extract_strided_slice %265 {offsets = [0, 32], sizes = [8, 32], strides = [1, 1]} : vector<8x128xf32> to vector<8x32xf32>
    %269 = vector.extract_strided_slice %266 {offsets = [0, 64], sizes = [8, 32], strides = [1, 1]} : vector<8x128xf32> to vector<8x32xf32>
    %270 = vector.extract_strided_slice %265 {offsets = [0, 96], sizes = [8, 32], strides = [1, 1]} : vector<8x128xf32> to vector<8x32xf32>
    %271 = arith.mulf %268, %234 : vector<8x32xf32>
    %272 = arith.mulf %267, %269 : vector<8x32xf32>
    %273 = arith.addf %271, %272 : vector<8x32xf32>
    %274 = math.tanh %273 : vector<8x32xf32>
    %275 = arith.mulf %270, %274 : vector<8x32xf32>
    %cst_53 = arith.constant dense<0.000000e+00> : vector<8x256xf32>
    %276 = tpu.matmul %257, %8, %cst_53 {dimension_numbers = #tpu.dot_dimension_numbers<[1], [0], [0], [1], [0, 0, 1, 1], [], []>} : vector<8x32xf32>, vector<32x256xf32>, vector<8x256xf32> -> vector<8x256xf32>
    %cst_54 = arith.constant dense<0.000000e+00> : vector<8x256xf32>
    %277 = tpu.matmul %275, %10, %cst_54 {dimension_numbers = #tpu.dot_dimension_numbers<[1], [0], [0], [1], [0, 0, 1, 1], [], []>} : vector<8x32xf32>, vector<32x256xf32>, vector<8x256xf32> -> vector<8x256xf32>
    %278 = arith.addf %276, %277 : vector<8x256xf32>
    %279 = vector.extract_strided_slice %278 {offsets = [0, 0], sizes = [8, 128], strides = [1, 1]} : vector<8x256xf32> to vector<8x128xf32>
    %280 = vector.extract_strided_slice %6 {offsets = [56, 0], sizes = [8, 128], strides = [1, 1]} : vector<64x128xf32> to vector<8x128xf32>
    %281 = arith.addf %279, %280 : vector<8x128xf32>
    %282 = arith.negf %281 : vector<8x128xf32>
    %283 = math.exp %282 : vector<8x128xf32>
    %cst_55 = arith.constant 1.000000e+00 : f32
    %284 = vector.broadcast %cst_55 : f32 to vector<8x128xf32>
    %285 = arith.addf %284, %283 : vector<8x128xf32>
    %286 = arith.divf %284, %285 : vector<8x128xf32>
    %287 = math.tanh %281 : vector<8x128xf32>
    %288 = vector.extract_strided_slice %286 {offsets = [0, 0], sizes = [8, 32], strides = [1, 1]} : vector<8x128xf32> to vector<8x32xf32>
    %289 = vector.extract_strided_slice %286 {offsets = [0, 32], sizes = [8, 32], strides = [1, 1]} : vector<8x128xf32> to vector<8x32xf32>
    %290 = vector.extract_strided_slice %287 {offsets = [0, 64], sizes = [8, 32], strides = [1, 1]} : vector<8x128xf32> to vector<8x32xf32>
    %291 = vector.extract_strided_slice %286 {offsets = [0, 96], sizes = [8, 32], strides = [1, 1]} : vector<8x128xf32> to vector<8x32xf32>
    %292 = arith.mulf %289, %255 : vector<8x32xf32>
    %293 = arith.mulf %288, %290 : vector<8x32xf32>
    %294 = arith.addf %292, %293 : vector<8x32xf32>
    %295 = math.tanh %294 : vector<8x32xf32>
    %296 = arith.mulf %291, %295 : vector<8x32xf32>
    %297 = vector.extract_strided_slice %278 {offsets = [0, 128], sizes = [8, 128], strides = [1, 1]} : vector<8x256xf32> to vector<8x128xf32>
    %298 = vector.broadcast %12 : vector<1x128xf32> to vector<8x128xf32>
    %299 = arith.addf %297, %298 : vector<8x128xf32>
    %300 = arith.negf %299 : vector<8x128xf32>
    %301 = math.exp %300 : vector<8x128xf32>
    %cst_56 = arith.constant 1.000000e+00 : f32
    %302 = vector.broadcast %cst_56 : f32 to vector<8x128xf32>
    %303 = arith.addf %302, %301 : vector<8x128xf32>
    %304 = arith.divf %302, %303 : vector<8x128xf32>
    %305 = math.tanh %299 : vector<8x128xf32>
    %306 = vector.extract_strided_slice %304 {offsets = [0, 0], sizes = [8, 32], strides = [1, 1]} : vector<8x128xf32> to vector<8x32xf32>
    %307 = vector.extract_strided_slice %304 {offsets = [0, 32], sizes = [8, 32], strides = [1, 1]} : vector<8x128xf32> to vector<8x32xf32>
    %308 = vector.extract_strided_slice %305 {offsets = [0, 64], sizes = [8, 32], strides = [1, 1]} : vector<8x128xf32> to vector<8x32xf32>
    %309 = vector.extract_strided_slice %304 {offsets = [0, 96], sizes = [8, 32], strides = [1, 1]} : vector<8x128xf32> to vector<8x32xf32>
    %310 = arith.mulf %307, %273 : vector<8x32xf32>
    %311 = arith.mulf %306, %308 : vector<8x32xf32>
    %312 = arith.addf %310, %311 : vector<8x32xf32>
    %313 = math.tanh %312 : vector<8x32xf32>
    %314 = arith.mulf %309, %313 : vector<8x32xf32>
    %cst_57 = arith.constant dense<0.000000e+00> : vector<8x256xf32>
    %315 = tpu.matmul %296, %8, %cst_57 {dimension_numbers = #tpu.dot_dimension_numbers<[1], [0], [0], [1], [0, 0, 1, 1], [], []>} : vector<8x32xf32>, vector<32x256xf32>, vector<8x256xf32> -> vector<8x256xf32>
    %cst_58 = arith.constant dense<0.000000e+00> : vector<8x256xf32>
    %316 = tpu.matmul %314, %10, %cst_58 {dimension_numbers = #tpu.dot_dimension_numbers<[1], [0], [0], [1], [0, 0, 1, 1], [], []>} : vector<8x32xf32>, vector<32x256xf32>, vector<8x256xf32> -> vector<8x256xf32>
    %317 = arith.addf %315, %316 : vector<8x256xf32>
    %318 = vector.extract_strided_slice %317 {offsets = [0, 128], sizes = [8, 128], strides = [1, 1]} : vector<8x256xf32> to vector<8x128xf32>
    %319 = vector.broadcast %12 : vector<1x128xf32> to vector<8x128xf32>
    %320 = arith.addf %318, %319 : vector<8x128xf32>
    %321 = arith.negf %320 : vector<8x128xf32>
    %322 = math.exp %321 : vector<8x128xf32>
    %cst_59 = arith.constant 1.000000e+00 : f32
    %323 = vector.broadcast %cst_59 : f32 to vector<8x128xf32>
    %324 = arith.addf %323, %322 : vector<8x128xf32>
    %325 = arith.divf %323, %324 : vector<8x128xf32>
    %326 = math.tanh %320 : vector<8x128xf32>
    %327 = vector.extract_strided_slice %325 {offsets = [0, 0], sizes = [8, 32], strides = [1, 1]} : vector<8x128xf32> to vector<8x32xf32>
    %328 = vector.extract_strided_slice %325 {offsets = [0, 32], sizes = [8, 32], strides = [1, 1]} : vector<8x128xf32> to vector<8x32xf32>
    %329 = vector.extract_strided_slice %326 {offsets = [0, 64], sizes = [8, 32], strides = [1, 1]} : vector<8x128xf32> to vector<8x32xf32>
    %330 = vector.extract_strided_slice %325 {offsets = [0, 96], sizes = [8, 32], strides = [1, 1]} : vector<8x128xf32> to vector<8x32xf32>
    %331 = arith.mulf %328, %312 : vector<8x32xf32>
    %332 = arith.mulf %327, %329 : vector<8x32xf32>
    %333 = arith.addf %331, %332 : vector<8x32xf32>
    %334 = math.tanh %333 : vector<8x32xf32>
    %335 = arith.mulf %330, %334 : vector<8x32xf32>
    %c0_60 = arith.constant 0 : index
    %c0_61 = arith.constant 0 : index
    %c0_62 = arith.constant 0 : index
    %336 = vector.load %arg9[%c0_60, %c0_61, %c0_62] : memref<2x8x32xf32, #tpu.memory_space<vmem>>, vector<1x8x32xf32>
    %337 = vector.shape_cast %336 : vector<1x8x32xf32> to vector<8x32xf32>
    %338 = vector.shape_cast %296 : vector<8x32xf32> to vector<1x8x32xf32>
    tpu.vector_store %arg9[%c0_60, %c0_61, %c0_62], %338 {strides = array<i32>} : memref<2x8x32xf32, #tpu.memory_space<vmem>>, vector<1x8x32xf32>,
    %c0_63 = arith.constant 0 : index
    %c0_64 = arith.constant 0 : index
    %c0_65 = arith.constant 0 : index
    %339 = vector.load %arg10[%c0_63, %c0_64, %c0_65] : memref<2x8x32xf32, #tpu.memory_space<vmem>>, vector<1x8x32xf32>
    %340 = vector.shape_cast %339 : vector<1x8x32xf32> to vector<8x32xf32>
    %341 = vector.shape_cast %294 : vector<8x32xf32> to vector<1x8x32xf32>
    tpu.vector_store %arg10[%c0_63, %c0_64, %c0_65], %341 {strides = array<i32>} : memref<2x8x32xf32, #tpu.memory_space<vmem>>, vector<1x8x32xf32>,
    %c1_66 = arith.constant 1 : index
    %c0_67 = arith.constant 0 : index
    %c0_68 = arith.constant 0 : index
    %342 = vector.load %arg9[%c1_66, %c0_67, %c0_68] : memref<2x8x32xf32, #tpu.memory_space<vmem>>, vector<1x8x32xf32>
    %343 = vector.shape_cast %342 : vector<1x8x32xf32> to vector<8x32xf32>
    %344 = vector.shape_cast %335 : vector<8x32xf32> to vector<1x8x32xf32>
    tpu.vector_store %arg9[%c1_66, %c0_67, %c0_68], %344 {strides = array<i32>} : memref<2x8x32xf32, #tpu.memory_space<vmem>>, vector<1x8x32xf32>,
    %c1_69 = arith.constant 1 : index
    %c0_70 = arith.constant 0 : index
    %c0_71 = arith.constant 0 : index
    %345 = vector.load %arg10[%c1_69, %c0_70, %c0_71] : memref<2x8x32xf32, #tpu.memory_space<vmem>>, vector<1x8x32xf32>
    %346 = vector.shape_cast %345 : vector<1x8x32xf32> to vector<8x32xf32>
    %347 = vector.shape_cast %333 : vector<8x32xf32> to vector<1x8x32xf32>
    tpu.vector_store %arg10[%c1_69, %c0_70, %c0_71], %347 {strides = array<i32>} : memref<2x8x32xf32, #tpu.memory_space<vmem>>, vector<1x8x32xf32>,
    %348 = tpu.concatenate %80, %119, %158, %197, %236, %275, %314, %335 in 0 : vector<8x32xf32>, vector<8x32xf32>, vector<8x32xf32>, vector<8x32xf32>, vector<8x32xf32>, vector<8x32xf32>, vector<8x32xf32>, vector<8x32xf32> -> vector<64x32xf32>
    %c0_72 = arith.constant 0 : index
    %c0_73 = arith.constant 0 : index
    %349 = vector.load %arg6[%c0_72, %c0_73] : memref<32x8xf32, #tpu.memory_space<vmem>>, vector<32x8xf32>
    %cst_74 = arith.constant dense<0.000000e+00> : vector<64x8xf32>
    %350 = tpu.matmul %348, %349, %cst_74 {dimension_numbers = #tpu.dot_dimension_numbers<[1], [0], [0], [1], [0, 0, 1, 1], [], []>} : vector<64x32xf32>, vector<32x8xf32>, vector<64x8xf32> -> vector<64x8xf32>
    %c0_75 = arith.constant 0 : index
    %c0_76 = arith.constant 0 : index
    %351 = vector.load %arg7[%c0_75, %c0_76] : memref<1x8xf32, #tpu.memory_space<vmem>>, vector<1x8xf32>
    %352 = vector.broadcast %351 : vector<1x8xf32> to vector<64x8xf32>
    %353 = arith.addf %350, %352 : vector<64x8xf32>
    %cst_77 = arith.constant dense<0xFF800000> : vector<64xf32>
    %354 = vector.multi_reduction <maximumf>, %353, %cst_77 [1] : vector<64x8xf32> to vector<64xf32>
    %355 = vector.shape_cast %354 : vector<64xf32> to vector<64x1xf32>
    %356 = vector.broadcast %355 : vector<64x1xf32> to vector<64x8xf32>
    %357 = arith.subf %353, %356 : vector<64x8xf32>
    %358 = math.exp %357 : vector<64x8xf32>
    %cst_78 = arith.constant dense<0.000000e+00> : vector<64xf32>
    %359 = vector.multi_reduction <add>, %358, %cst_78 [1] : vector<64x8xf32> to vector<64xf32>
    %360 = vector.shape_cast %359 : vector<64xf32> to vector<64x1xf32>
    %361 = math.log %360 : vector<64x1xf32>
    %362 = vector.broadcast %361 : vector<64x1xf32> to vector<64x8xf32>
    %363 = arith.subf %357, %362 : vector<64x8xf32>
    %c0_79 = arith.constant 0 : index
    %c0_80 = arith.constant 0 : index
    %364 = vector.load %arg8[%c0_79, %c0_80] : memref<64x8xf32, #tpu.memory_space<vmem>>, vector<64x8xf32>
    tpu.vector_store %arg8[%c0_79, %c0_80], %363 {strides = array<i32>} : memref<64x8xf32, #tpu.memory_space<vmem>>, vector<64x8xf32>,
    return
  }
}

</mosaic_0001>

<llo_original>
// kernel: tpu_custom_call.1
$region0: #{tpu_custom_call.1}
  #allocation0 [shape = 'u32[]', space=smem, size = 0x4, offset = 0x4, fixed_abs, tag = 'smem constant byte address 0x4 - core index']
  #allocation1 [shape = 'u32[144,128]{1,0:T(1,128)}', space=vmem, size = 0x12000, scoped, tag = 'internal scratch']
  %s0 = inlined_call_operand.vmem [shape: f32[64,4], index: 0, kind: input, shape index: {}]
  %s1 = inlined_call_operand.vmem [shape: f32[4,128], index: 1, kind: input, shape index: {}]
  %s2 = inlined_call_operand.hbm [shape: f32[2,32,256], index: 2, kind: input, shape index: {}]
  %s3 = inlined_call_operand.vmem [shape: f32[2,1,128], index: 3, kind: input, shape index: {}]
  %s4 = inlined_call_operand.vmem [shape: f32[2,8,32], index: 4, kind: input, shape index: {}]
  %s5 = inlined_call_operand.vmem [shape: f32[2,8,32], index: 5, kind: input, shape index: {}]
  %s6 = inlined_call_operand.vmem [shape: f32[32,8], index: 6, kind: input, shape index: {}]
  %s7 = inlined_call_operand.vmem [shape: f32[1,8], index: 7, kind: input, shape index: {}]
  %s8 = inlined_call_operand.vmem [shape: f32[64,8], index: 8, kind: output, shape index: {0}]
  %s9 = inlined_call_operand.hbm [shape: f32[2,8,32], index: 9, kind: output, shape index: {1}]
  %s10 = inlined_call_operand.hbm [shape: f32[2,8,32], index: 10, kind: output, shape index: {2}]
  %11 = xla_tuple %s8, %s9, %s10
  %s12 = sld [smem:[#allocation0]]
  $region62: #{tpu_custom_call.1} parent=0
    _
  %s14 = ssub.s32 1, %s12
  %s15 = scalar_select 0, %s14, %s12
  $region1: #{tpu_custom_call.1} parent=0
    #allocation2 [shape = 'u8[65536]{0}', space=vmem, size = 0x10000, scoped, tag = 'input window, operand 2, single buffered']
    #allocation3 [shape = 's32[1]{0}', space=sflag, size = 0x4, scoped, tag = 'scoped memory for tpu_custom_call.1']
    #allocation4 [shape = 's32[1]{0}', space=sflag, size = 0x4, scoped, tag = 'scoped memory for tpu_custom_call.1']
    #allocation5 [shape = 'u8[8192]{0}', space=vmem, size = 0x2000, scoped, tag = 'output window, operand 1, single buffered']
    #allocation6 [shape = 'u8[8192]{0}', space=vmem, size = 0x2000, scoped, tag = 'output window, operand 2, single buffered']
    #allocation7 [shape = 's32[1]{0}', space=sflag, size = 0x4, scoped, tag = 'scoped memory for tpu_custom_call.1']
    %16 = vsyncpa [#allocation3], 0
    %17 = vsyncpa [#allocation4], 0
    %18 = vsyncpa [#allocation7], 0
    // Predicated region
    $region2: #{tpu_custom_call.1} parent=1 // pred_check
      _
    $region3: #{tpu_custom_call.1} parent=1 // pred_check_branch
      %20 = sbr.rel (0) target = $region5
    $region4: #{tpu_custom_call.1} parent=1 // pred_region
      _
    $region5: #{tpu_custom_call.1} parent=1 // pred_fallthru
      _
    // Predicated region
    $region6: #{tpu_custom_call.1} parent=1 // pred_check
      _
    $region7: #{tpu_custom_call.1} parent=1 // pred_check_branch
      %22 = sbr.rel (0) target = $region9
    $region8: #{tpu_custom_call.1} parent=1 // pred_region
      _
    $region9: #{tpu_custom_call.1} parent=1 // pred_fallthru
      _
    // Predicated region
    $region10: #{tpu_custom_call.1} parent=1 // pred_check
      _
    $region11: #{tpu_custom_call.1} parent=1 // pred_check_branch
      %24 = sbr.rel (0) target = $region13
    $region12: #{tpu_custom_call.1} parent=1 // pred_region
      %s26 = ssub.s32 2048, 2048
      %27 = vsyncadd [#allocation3], %s26
      %s28 = sshll.u32 [#allocation2], 4
      %s29 = int_to_ptr.vmem [resolvable:$true] %s28
      %34 = dma.hbm_to_vmem [thread:$0]  %s2, 2048, %s29, [#allocation3], 256, 256, 16
    $region13: #{tpu_custom_call.1} parent=1 // pred_fallthru
      _
    // Predicated region
    $region14: #{tpu_custom_call.1} parent=1 // pred_check
      _
    $region15: #{tpu_custom_call.1} parent=1 // pred_check_branch
      %36 = sbr.rel (0) target = $region17
    $region16: #{tpu_custom_call.1} parent=1 // pred_region
      _
    $region17: #{tpu_custom_call.1} parent=1 // pred_fallthru
      _
    // Predicated region
    $region18: #{tpu_custom_call.1} parent=1 // pred_check
      _
    $region19: #{tpu_custom_call.1} parent=1 // pred_check_branch
      %38 = sbr.rel (0) target = $region21
    $region20: #{tpu_custom_call.1} parent=1 // pred_region
      _
    $region21: #{tpu_custom_call.1} parent=1 // pred_fallthru
      _
    // Predicated region
    $region22: #{tpu_custom_call.1} parent=1 // pred_check
      _
    $region23: #{tpu_custom_call.1} parent=1 // pred_check_branch
      %40 = sbr.rel (0) target = $region25
    $region24: #{tpu_custom_call.1} parent=1 // pred_region
      _
    $region25: #{tpu_custom_call.1} parent=1 // pred_fallthru
      _
    // Predicated region
    $region26: #{tpu_custom_call.1} parent=1 // pred_check
      _
    $region27: #{tpu_custom_call.1} parent=1 // pred_check_branch
      %42 = sbr.rel (0) target = $region29
    $region28: #{tpu_custom_call.1} parent=1 // pred_region
      _
    $region29: #{tpu_custom_call.1} parent=1 // pred_fallthru
      _
    // Predicated region
    $region30: #{tpu_custom_call.1} parent=1 // pred_check
      _
    $region31: #{tpu_custom_call.1} parent=1 // pred_check_branch
      %44 = sbr.rel (0) target = $region33
    $region32: #{tpu_custom_call.1} parent=1 // pred_region
      _
    $region33: #{tpu_custom_call.1} parent=1 // pred_fallthru
      _
    // Predicated region
    $region34: #{tpu_custom_call.1} parent=1 // pred_check
      _
    $region35: #{tpu_custom_call.1} parent=1 // pred_check_branch
      %46 = sbr.rel (0) target = $region37
    $region36: #{tpu_custom_call.1} parent=1 // pred_region
      %47 = dma.done [#allocation3], 2048
    $region37: #{tpu_custom_call.1} parent=1 // pred_fallthru
      _
    %v48 = vld [vmem:[%s0] sm:$0xff]
    %v49 = vld [vmem:[%s0 + $0x8] sm:$0xff]
    %v50 = vld [vmem:[%s0 + $0x10] sm:$0xff]
    %v51 = vld [vmem:[%s0 + $0x18] sm:$0xff]
    %v52 = vld [vmem:[%s0 + $0x20] sm:$0xff]
    %v53 = vld [vmem:[%s0 + $0x28] sm:$0xff]
    %v54 = vld [vmem:[%s0 + $0x30] sm:$0xff]
    %v55 = vld [vmem:[%s0 + $0x38] sm:$0xff]
    %v56 = vld [vmem:[%s1] sm:$0xf]
    %v57 = vld [vmem:[%s3] sm:$0x1]
    %v59 = vlaneseq
    %v60 = vshrl.u32 %v59, 7
    %v61 = vsub.s32 0, %v60
    %v62 = vrot.slane %v57, %v61
    %vm64 = vcmask 31744
    %v66 = vsel %vm64, %v48, 0
    %v69 = vsel %vm64, %v49, 0
    %v72 = vsel %vm64, %v50, 0
    %v75 = vsel %vm64, %v51, 0
    %v78 = vsel %vm64, %v52, 0
    %v81 = vsel %vm64, %v53, 0
    %v84 = vsel %vm64, %v54, 0
    %v87 = vsel %vm64, %v55, 0
    %vm89 = vcmask 1043456
    %v91 = vsel %vm89, %v56, 0
    %93 = vmatprep.subr.mxu0 0.0
    %94 = vmatpush1.msra.mxu0 0.0
    %95 = vmatprep.subr.mxu0 0.0
    %96 = vmatpush1.msra.mxu0 0.0
    %97 = vmatprep.subr.mxu0 0.0
    %98 = vmatpush1.msra.mxu0 0.0
    %99 = vmatprep.subr.mxu0 0.0
    %100 = vmatpush1.msra.mxu0 0.0
    %101 = vmatprep.subr.mxu0 0.0
    %102 = vmatpush1.msra.mxu0 0.0
    %103 = vmatprep.subr.mxu0 0.0
    %104 = vmatpush1.msra.mxu0 0.0
    %105 = vmatprep.subr.mxu0 0.0
    %106 = vmatpush1.msra.mxu0 0.0
    %107 = vmatprep.subr.mxu0 0.0
    %108 = vmatpush1.msra.mxu0 0.0
    %109 = vmatprep.subr.mxu0 0.0
    %110 = vmatpush1.msra.mxu0 0.0
    %111 = vmatprep.subr.mxu0 0.0
    %112 = vmatpush1.msra.mxu0 0.0
    %113 = vmatprep.subr.mxu0 0.0
    %114 = vmatpush1.msra.mxu0 0.0
    %115 = vmatprep.subr.mxu0 0.0
    %116 = vmatpush1.msra.mxu0 0.0
    %117 = vmatprep.subr.mxu0 0.0
    %118 = vmatpush1.msra.mxu0 0.0
    %119 = vmatprep.subr.mxu0 0.0
    %120 = vmatpush1.msra.mxu0 0.0
    %121 = vmatprep.subr.mxu0 0.0
    %122 = vmatpush1.msra.mxu0 0.0
    %123 = vmatprep.subr.mxu0 0.0
    %124 = vmatpush1.msra.mxu0 %v91
    %125 = vmatprep.subr.mxu0 0.0
    %126 = vmatpush2.msra.mxu0 0.0
    %127 = vmatprep.subr.mxu0 0.0
    %128 = vmatpush2.msra.mxu0 0.0
    %129 = vmatprep.subr.mxu0 0.0
    %130 = vmatpush2.msra.mxu0 0.0
    %131 = vmatprep.subr.mxu0 0.0
    %132 = vmatpush2.msra.mxu0 0.0
    %133 = vmatprep.subr.mxu0 0.0
    %134 = vmatpush2.msra.mxu0 0.0
    %135 = vmatprep.subr.mxu0 0.0
    %136 = vmatpush2.msra.mxu0 0.0
    %137 = vmatprep.subr.mxu0 0.0
    %138 = vmatpush2.msra.mxu0 0.0
    %139 = vmatprep.subr.mxu0 0.0
    %140 = vmatpush2.msra.mxu0 0.0
    %141 = vmatprep.subr.mxu0 0.0
    %142 = vmatpush2.msra.mxu0 0.0
    %143 = vmatprep.subr.mxu0 0.0
    %144 = vmatpush2.msra.mxu0 0.0
    %145 = vmatprep.subr.mxu0 0.0
    %146 = vmatpush2.msra.mxu0 0.0
    %147 = vmatprep.subr.mxu0 0.0
    %148 = vmatpush2.msra.mxu0 0.0
    %149 = vmatprep.subr.mxu0 0.0
    %150 = vmatpush2.msra.mxu0 0.0
    %151 = vmatprep.subr.mxu0 0.0
    %152 = vmatpush2.msra.mxu0 0.0
    %153 = vmatprep.subr.mxu0 0.0
    %154 = vmatpush2.msra.mxu0 0.0
    %155 = vmatprep.subr.mxu0 0.0
    %156 = vmatpush2.msra.mxu0 0.0
    %157 = vmatprep.mubr.f32.mxu0 0.0
    %158 = vmatmul.mubr.f32.gmra.mxu0 %v66
    %v159 = vpop.f32.mrf.mxu0
    %v160 = vadd.f32 %v62, %v159
    %v161 = vpop.f32.mrf.mxu0
    %162 = vmatprep.mubr.f32.mxu0 0.0
    %163 = vmatmul.mubr.f32.gmra.mxu0 %v69
    %v164 = vpop.f32.mrf.mxu0
    %v165 = vadd.f32 %v62, %v164
    %v166 = vpop.f32.mrf.mxu0
    %167 = vmatprep.mubr.f32.mxu0 0.0
    %168 = vmatmul.mubr.f32.gmra.mxu0 %v72
    %v169 = vpop.f32.mrf.mxu0
    %v170 = vadd.f32 %v62, %v169
    %v171 = vpop.f32.mrf.mxu0
    %172 = vmatprep.mubr.f32.mxu0 0.0
    %173 = vmatmul.mubr.f32.gmra.mxu0 %v75
    %v174 = vpop.f32.mrf.mxu0
    %v175 = vadd.f32 %v62, %v174
    %v176 = vpop.f32.mrf.mxu0
    %177 = vmatprep.mubr.f32.mxu0 0.0
    %178 = vmatmul.mubr.f32.gmra.mxu0 %v78
    %v179 = vpop.f32.mrf.mxu0
    %v180 = vadd.f32 %v62, %v179
    %v181 = vpop.f32.mrf.mxu0
    %182 = vmatprep.mubr.f32.mxu0 0.0
    %183 = vmatmul.mubr.f32.gmra.mxu0 %v81
    %v184 = vpop.f32.mrf.mxu0
    %v185 = vadd.f32 %v62, %v184
    %v186 = vpop.f32.mrf.mxu0
    %187 = vmatprep.mubr.f32.mxu0 0.0
    %188 = vmatmul.mubr.f32.gmra.mxu0 %v84
    %v189 = vpop.f32.mrf.mxu0
    %v190 = vadd.f32 %v62, %v189
    %v191 = vpop.f32.mrf.mxu0
    %192 = vmatprep.mubr.f32.mxu0 0.0
    %193 = vmatmul.mubr.f32.gmra.mxu0 %v87
    %v194 = vpop.f32.mrf.mxu0
    %v195 = vadd.f32 %v62, %v194
    %v196 = vpop.f32.mrf.mxu0
    %197 = vdwg.mxu0
    %v198 = vld [vmem:[#allocation2] sm:$0xff]
    %v199 = vld [vmem:[#allocation2 + $0x8] sm:$0xff]
    %v200 = vld [vmem:[#allocation2 + $0x10] sm:$0xff]
    %v201 = vld [vmem:[#allocation2 + $0x18] sm:$0xff]
    %v202 = vld [vmem:[#allocation2 + $0x20] sm:$0xff]
    %v203 = vld [vmem:[#allocation2 + $0x28] sm:$0xff]
    %v204 = vld [vmem:[#allocation2 + $0x30] sm:$0xff]
    %v205 = vld [vmem:[#allocation2 + $0x38] sm:$0xff]
    %s206 = scalar_lea.vmem [#allocation2], 64
    %v207 = vld [vmem:[%s206] sm:$0xff]
    %v208 = vld [vmem:[%s206 + $0x8] sm:$0xff]
    %v209 = vld [vmem:[%s206 + $0x10] sm:$0xff]
    %v210 = vld [vmem:[%s206 + $0x18] sm:$0xff]
    %v211 = vld [vmem:[%s206 + $0x20] sm:$0xff]
    %v212 = vld [vmem:[%s206 + $0x28] sm:$0xff]
    %v213 = vld [vmem:[%s206 + $0x30] sm:$0xff]
    %v214 = vld [vmem:[%s206 + $0x38] sm:$0xff]
    %s215 = scalar_lea.vmem %s3, 1
    %v216 = vld [vmem:[%s215] sm:$0x1]
    %v217 = vld [vmem:[%s4] sm:$0xff]
    %s218 = scalar_lea.vmem %s4, 8
    %v219 = vld [vmem:[%s218] sm:$0xff]
    %v220 = vld [vmem:[%s5] sm:$0xff]
    %s221 = scalar_lea.vmem %s5, 8
    %v222 = vld [vmem:[%s221] sm:$0xff]
    %vm223 = vcmask 261120
    %v225 = vsel %vm223, %v219, 0
    %227 = vmatprep.subr.mxu0 0.0
    %228 = vmatpush1.msra.mxu0 0.0
    %229 = vmatprep.subr.mxu0 0.0
    %230 = vmatpush1.msra.mxu0 0.0
    %231 = vmatprep.subr.mxu0 0.0
    %232 = vmatpush1.msra.mxu0 0.0
    %233 = vmatprep.subr.mxu0 0.0
    %234 = vmatpush1.msra.mxu0 0.0
    %235 = vmatprep.subr.mxu0 0.0
    %236 = vmatpush1.msra.mxu0 0.0
    %237 = vmatprep.subr.mxu0 0.0
    %238 = vmatpush1.msra.mxu0 0.0
    %239 = vmatprep.subr.mxu0 0.0
    %240 = vmatpush1.msra.mxu0 0.0
    %241 = vmatprep.subr.mxu0 0.0
    %242 = vmatpush1.msra.mxu0 0.0
    %243 = vmatprep.subr.mxu0 0.0
    %244 = vmatpush1.msra.mxu0 0.0
    %245 = vmatprep.subr.mxu0 0.0
    %246 = vmatpush1.msra.mxu0 0.0
    %247 = vmatprep.subr.mxu0 0.0
    %248 = vmatpush1.msra.mxu0 0.0
    %249 = vmatprep.subr.mxu0 0.0
    %250 = vmatpush1.msra.mxu0 0.0
    %251 = vmatprep.subr.mxu0 %v214
    %252 = vmatpush1.msra.mxu0 %v213
    %253 = vmatprep.subr.mxu0 %v212
    %254 = vmatpush1.msra.mxu0 %v211
    %255 = vmatprep.subr.mxu0 %v210
    %256 = vmatpush1.msra.mxu0 %v209
    %257 = vmatprep.subr.mxu0 %v208
    %258 = vmatpush1.msra.mxu0 %v207
    %259 = vmatprep.subr.mxu0 0.0
    %260 = vmatpush2.msra.mxu0 0.0
    %261 = vmatprep.subr.mxu0 0.0
    %262 = vmatpush2.msra.mxu0 0.0
    %263 = vmatprep.subr.mxu0 0.0
    %264 = vmatpush2.msra.mxu0 0.0
    %265 = vmatprep.subr.mxu0 0.0
    %266 = vmatpush2.msra.mxu0 0.0
    %267 = vmatprep.subr.mxu0 0.0
    %268 = vmatpush2.msra.mxu0 0.0
    %269 = vmatprep.subr.mxu0 0.0
    %270 = vmatpush2.msra.mxu0 0.0
    %271 = vmatprep.subr.mxu0 0.0
    %272 = vmatpush2.msra.mxu0 0.0
    %273 = vmatprep.subr.mxu0 0.0
    %274 = vmatpush2.msra.mxu0 0.0
    %275 = vmatprep.subr.mxu0 0.0
    %276 = vmatpush2.msra.mxu0 0.0
    %277 = vmatprep.subr.mxu0 0.0
    %278 = vmatpush2.msra.mxu0 0.0
    %279 = vmatprep.subr.mxu0 0.0
    %280 = vmatpush2.msra.mxu0 0.0
    %281 = vmatprep.subr.mxu0 0.0
    %282 = vmatpush2.msra.mxu0 0.0
    %283 = vmatprep.subr.mxu0 0.0
    %284 = vmatpush2.msra.mxu0 0.0
    %285 = vmatprep.subr.mxu0 0.0
    %286 = vmatpush2.msra.mxu0 0.0
    %287 = vmatprep.subr.mxu0 0.0
    %288 = vmatpush2.msra.mxu0 0.0
    %289 = vmatprep.subr.mxu0 0.0
    %290 = vmatpush2.msra.mxu0 0.0
    %291 = vmatprep.mubr.f32.mxu0 0.0
    %292 = vmatmul.mubr.f32.gmra.mxu0 %v225
    %v293 = vpop.f32.mrf.mxu0
    %v294 = vadd.f32 0.0, %v293
    %v295 = vpop.f32.mrf.mxu0
    %v296 = vadd.f32 0.0, %v295
    %297 = vdwg.mxu0
    %v299 = vsel %vm223, %v217, 0
    %301 = vmatprep.subr.mxu0 0.0
    %302 = vmatpush1.msra.mxu0 0.0
    %303 = vmatprep.subr.mxu0 0.0
    %304 = vmatpush1.msra.mxu0 0.0
    %305 = vmatprep.subr.mxu0 0.0
    %306 = vmatpush1.msra.mxu0 0.0
    %307 = vmatprep.subr.mxu0 0.0
    %308 = vmatpush1.msra.mxu0 0.0
    %309 = vmatprep.subr.mxu0 0.0
    %310 = vmatpush1.msra.mxu0 0.0
    %311 = vmatprep.subr.mxu0 0.0
    %312 = vmatpush1.msra.mxu0 0.0
    %313 = vmatprep.subr.mxu0 0.0
    %314 = vmatpush1.msra.mxu0 0.0
    %315 = vmatprep.subr.mxu0 0.0
    %316 = vmatpush1.msra.mxu0 0.0
    %317 = vmatprep.subr.mxu0 0.0
    %318 = vmatpush1.msra.mxu0 0.0
    %319 = vmatprep.subr.mxu0 0.0
    %320 = vmatpush1.msra.mxu0 0.0
    %321 = vmatprep.subr.mxu0 0.0
    %322 = vmatpush1.msra.mxu0 0.0
    %323 = vmatprep.subr.mxu0 0.0
    %324 = vmatpush1.msra.mxu0 0.0
    %325 = vmatprep.subr.mxu0 %v205
    %326 = vmatpush1.msra.mxu0 %v204
    %327 = vmatprep.subr.mxu0 %v203
    %328 = vmatpush1.msra.mxu0 %v202
    %329 = vmatprep.subr.mxu0 %v201
    %330 = vmatpush1.msra.mxu0 %v200
    %331 = vmatprep.subr.mxu0 %v199
    %332 = vmatpush1.msra.mxu0 %v198
    %333 = vmatprep.subr.mxu0 0.0
    %334 = vmatpush2.msra.mxu0 0.0
    %335 = vmatprep.subr.mxu0 0.0
    %336 = vmatpush2.msra.mxu0 0.0
    %337 = vmatprep.subr.mxu0 0.0
    %338 = vmatpush2.msra.mxu0 0.0
    %339 = vmatprep.subr.mxu0 0.0
    %340 = vmatpush2.msra.mxu0 0.0
    %341 = vmatprep.subr.mxu0 0.0
    %342 = vmatpush2.msra.mxu0 0.0
    %343 = vmatprep.subr.mxu0 0.0
    %344 = vmatpush2.msra.mxu0 0.0
    %345 = vmatprep.subr.mxu0 0.0
    %346 = vmatpush2.msra.mxu0 0.0
    %347 = vmatprep.subr.mxu0 0.0
    %348 = vmatpush2.msra.mxu0 0.0
    %349 = vmatprep.subr.mxu0 0.0
    %350 = vmatpush2.msra.mxu0 0.0
    %351 = vmatprep.subr.mxu0 0.0
    %352 = vmatpush2.msra.mxu0 0.0
    %353 = vmatprep.subr.mxu0 0.0
    %354 = vmatpush2.msra.mxu0 0.0
    %355 = vmatprep.subr.mxu0 0.0
    %356 = vmatpush2.msra.mxu0 0.0
    %357 = vmatprep.subr.mxu0 0.0
    %358 = vmatpush2.msra.mxu0 0.0
    %359 = vmatprep.subr.mxu0 0.0
    %360 = vmatpush2.msra.mxu0 0.0
    %361 = vmatprep.subr.mxu0 0.0
    %362 = vmatpush2.msra.mxu0 0.0
    %363 = vmatprep.subr.mxu0 0.0
    %364 = vmatpush2.msra.mxu0 0.0
    %365 = vmatprep.mubr.f32.mxu0 0.0
    %366 = vmatmul.mubr.f32.gmra.mxu0 %v299
    %v367 = vpop.f32.mrf.mxu0
    %v368 = vadd.f32 %v294, %v367
    %v369 = vpop.f32.mrf.mxu0
    %370 = vdwg.mxu0
    %v371 = vadd.f32 %v368, %v160
    %v372 = vxor.u32 %v371, 2147483648
    %v373 = vmul.f32 %v372, 1.442695
    %v374 = vpow.pop %v373
    %v375 = vadd.f32 %v374, 1.0
    %v376 = vrcp.pop %v375
    %v377 = vmul.f32 1.0, %v376
    %v378 = vtanh.pop %v371
    %380 = vrot.lane.b32.xlu0 %v220, 32
    %v381 = vpop.permute.xlu0 %380
    %v383 = vmul.f32 %v377, %v381
    %385 = vrot.lane.b32.xlu0 %v378, 64
    %v386 = vpop.permute.xlu0 %385
    %v388 = vmul.f32 %v377, %v386
    %390 = vrot.lane.b32.xlu0 %v388, 32
    %v391 = vpop.permute.xlu0 %390
    %v393 = vadd.f32 %v383, %v391
    %v394 = vtanh.pop %v393
    %396 = vrot.lane.b32.xlu0 %v394, 64
    %v397 = vpop.permute.xlu0 %396
    %v399 = vmul.f32 %v377, %v397
    %401 = vrot.lane.b32.xlu0 %v399, 32
    %v402 = vpop.permute.xlu0 %401
    %v403 = vsel %vm223, %v402, 0
    %405 = vmatprep.subr.mxu0 0.0
    %406 = vmatpush1.msra.mxu0 0.0
    %407 = vmatprep.subr.mxu0 0.0
    %408 = vmatpush1.msra.mxu0 0.0
    %409 = vmatprep.subr.mxu0 0.0
    %410 = vmatpush1.msra.mxu0 0.0
    %411 = vmatprep.subr.mxu0 0.0
    %412 = vmatpush1.msra.mxu0 0.0
    %413 = vmatprep.subr.mxu0 0.0
    %414 = vmatpush1.msra.mxu0 0.0
    %415 = vmatprep.subr.mxu0 0.0
    %416 = vmatpush1.msra.mxu0 0.0
    %417 = vmatprep.subr.mxu0 0.0
    %418 = vmatpush1.msra.mxu0 0.0
    %419 = vmatprep.subr.mxu0 0.0
    %420 = vmatpush1.msra.mxu0 0.0
    %421 = vmatprep.subr.mxu0 0.0
    %422 = vmatpush1.msra.mxu0 0.0
    %423 = vmatprep.subr.mxu0 0.0
    %424 = vmatpush1.msra.mxu0 0.0
    %425 = vmatprep.subr.mxu0 0.0
    %426 = vmatpush1.msra.mxu0 0.0
    %427 = vmatprep.subr.mxu0 0.0
    %428 = vmatpush1.msra.mxu0 0.0
    %429 = vmatprep.subr.mxu0 %v205
    %430 = vmatpush1.msra.mxu0 %v204
    %431 = vmatprep.subr.mxu0 %v203
    %432 = vmatpush1.msra.mxu0 %v202
    %433 = vmatprep.subr.mxu0 %v201
    %434 = vmatpush1.msra.mxu0 %v200
    %435 = vmatprep.subr.mxu0 %v199
    %436 = vmatpush1.msra.mxu0 %v198
    %437 = vmatprep.subr.mxu0 0.0
    %438 = vmatpush2.msra.mxu0 0.0
    %439 = vmatprep.subr.mxu0 0.0
    %440 = vmatpush2.msra.mxu0 0.0
    %441 = vmatprep.subr.mxu0 0.0
    %442 = vmatpush2.msra.mxu0 0.0
    %443 = vmatprep.subr.mxu0 0.0
    %444 = vmatpush2.msra.mxu0 0.0
    %445 = vmatprep.subr.mxu0 0.0
    %446 = vmatpush2.msra.mxu0 0.0
    %447 = vmatprep.subr.mxu0 0.0
    %448 = vmatpush2.msra.mxu0 0.0
    %449 = vmatprep.subr.mxu0 0.0
    %450 = vmatpush2.msra.mxu0 0.0
    %451 = vmatprep.subr.mxu0 0.0
    %452 = vmatpush2.msra.mxu0 0.0
    %453 = vmatprep.subr.mxu0 0.0
    %454 = vmatpush2.msra.mxu0 0.0
    %455 = vmatprep.subr.mxu0 0.0
    %456 = vmatpush2.msra.mxu0 0.0
    %457 = vmatprep.subr.mxu0 0.0
    %458 = vmatpush2.msra.mxu0 0.0
    %459 = vmatprep.subr.mxu0 0.0
    %460 = vmatpush2.msra.mxu0 0.0
    %461 = vmatprep.subr.mxu0 0.0
    %462 = vmatpush2.msra.mxu0 0.0
    %463 = vmatprep.subr.mxu0 0.0
    %464 = vmatpush2.msra.mxu0 0.0
    %465 = vmatprep.subr.mxu0 0.0
    %466 = vmatpush2.msra.mxu0 0.0
    %467 = vmatprep.subr.mxu0 0.0
    %468 = vmatpush2.msra.mxu0 0.0
    %469 = vmatprep.mubr.f32.mxu0 0.0
    %470 = vmatmul.mubr.f32.gmra.mxu0 %v403
    %v471 = vpop.f32.mrf.mxu0
    %v472 = vadd.f32 %v294, %v471
    %v473 = vpop.f32.mrf.mxu0
    %v474 = vadd.f32 %v296, %v473
    %475 = vdwg.mxu0
    %v476 = vadd.f32 %v472, %v165
    %v477 = vxor.u32 %v476, 2147483648
    %v478 = vmul.f32 %v477, 1.442695
    %v479 = vpow.pop %v478
    %v480 = vadd.f32 %v479, 1.0
    %v481 = vrcp.pop %v480
    %v482 = vmul.f32 1.0, %v481
    %v483 = vtanh.pop %v476
    %v484 = vmul.f32 %v482, %v393
    %486 = vrot.lane.b32.xlu0 %v483, 64
    %v487 = vpop.permute.xlu0 %486
    %v489 = vmul.f32 %v482, %v487
    %491 = vrot.lane.b32.xlu0 %v489, 32
    %v492 = vpop.permute.xlu0 %491
    %v494 = vadd.f32 %v484, %v492
    %v495 = vtanh.pop %v494
    %497 = vrot.lane.b32.xlu0 %v495, 64
    %v498 = vpop.permute.xlu0 %497
    %v500 = vmul.f32 %v482, %v498
    %v502 = vlaneseq
    %v503 = vshrl.u32 %v502, 7
    %v504 = vsub.s32 0, %v503
    %v505 = vrot.slane %v216, %v504
    %v507 = vadd.f32 %v474, %v505
    %v508 = vxor.u32 %v507, 2147483648
    %v509 = vmul.f32 %v508, 1.442695
    %v510 = vpow.pop %v509
    %v511 = vadd.f32 %v510, 1.0
    %v512 = vrcp.pop %v511
    %v513 = vmul.f32 1.0, %v512
    %v514 = vtanh.pop %v507
    %516 = vrot.lane.b32.xlu0 %v222, 32
    %v517 = vpop.permute.xlu0 %516
    %v519 = vmul.f32 %v513, %v517
    %521 = vrot.lane.b32.xlu0 %v514, 64
    %v522 = vpop.permute.xlu0 %521
    %v524 = vmul.f32 %v513, %v522
    %526 = vrot.lane.b32.xlu0 %v524, 32
    %v527 = vpop.permute.xlu0 %526
    %v529 = vadd.f32 %v519, %v527
    %v530 = vtanh.pop %v529
    %532 = vrot.lane.b32.xlu0 %v530, 64
    %v533 = vpop.permute.xlu0 %532
    %v535 = vmul.f32 %v513, %v533
    %537 = vrot.lane.b32.xlu0 %v535, 32
    %v538 = vpop.permute.xlu0 %537
    %v539 = vsel %vm223, %v538, 0
    %541 = vmatprep.subr.mxu0 0.0
    %542 = vmatpush1.msra.mxu0 0.0
    %543 = vmatprep.subr.mxu0 0.0
    %544 = vmatpush1.msra.mxu0 0.0
    %545 = vmatprep.subr.mxu0 0.0
    %546 = vmatpush1.msra.mxu0 0.0
    %547 = vmatprep.subr.mxu0 0.0
    %548 = vmatpush1.msra.mxu0 0.0
    %549 = vmatprep.subr.mxu0 0.0
    %550 = vmatpush1.msra.mxu0 0.0
    %551 = vmatprep.subr.mxu0 0.0
    %552 = vmatpush1.msra.mxu0 0.0
    %553 = vmatprep.subr.mxu0 0.0
    %554 = vmatpush1.msra.mxu0 0.0
    %555 = vmatprep.subr.mxu0 0.0
    %556 = vmatpush1.msra.mxu0 0.0
    %557 = vmatprep.subr.mxu0 0.0
    %558 = vmatpush1.msra.mxu0 0.0
    %559 = vmatprep.subr.mxu0 0.0
    %560 = vmatpush1.msra.mxu0 0.0
    %561 = vmatprep.subr.mxu0 0.0
    %562 = vmatpush1.msra.mxu0 0.0
    %563 = vmatprep.subr.mxu0 0.0
    %564 = vmatpush1.msra.mxu0 0.0
    %565 = vmatprep.subr.mxu0 %v214
    %566 = vmatpush1.msra.mxu0 %v213
    %567 = vmatprep.subr.mxu0 %v212
    %568 = vmatpush1.msra.mxu0 %v211
    %569 = vmatprep.subr.mxu0 %v210
    %570 = vmatpush1.msra.mxu0 %v209
    %571 = vmatprep.subr.mxu0 %v208
    %572 = vmatpush1.msra.mxu0 %v207
    %573 = vmatprep.subr.mxu0 0.0
    %574 = vmatpush2.msra.mxu0 0.0
    %575 = vmatprep.subr.mxu0 0.0
    %576 = vmatpush2.msra.mxu0 0.0
    %577 = vmatprep.subr.mxu0 0.0
    %578 = vmatpush2.msra.mxu0 0.0
    %579 = vmatprep.subr.mxu0 0.0
    %580 = vmatpush2.msra.mxu0 0.0
    %581 = vmatprep.subr.mxu0 0.0
    %582 = vmatpush2.msra.mxu0 0.0
    %583 = vmatprep.subr.mxu0 0.0
    %584 = vmatpush2.msra.mxu0 0.0
    %585 = vmatprep.subr.mxu0 0.0
    %586 = vmatpush2.msra.mxu0 0.0
    %587 = vmatprep.subr.mxu0 0.0
    %588 = vmatpush2.msra.mxu0 0.0
    %589 = vmatprep.subr.mxu0 0.0
    %590 = vmatpush2.msra.mxu0 0.0
    %591 = vmatprep.subr.mxu0 0.0
    %592 = vmatpush2.msra.mxu0 0.0
    %593 = vmatprep.subr.mxu0 0.0
    %594 = vmatpush2.msra.mxu0 0.0
    %595 = vmatprep.subr.mxu0 0.0
    %596 = vmatpush2.msra.mxu0 0.0
    %597 = vmatprep.subr.mxu0 0.0
    %598 = vmatpush2.msra.mxu0 0.0
    %599 = vmatprep.subr.mxu0 0.0
    %600 = vmatpush2.msra.mxu0 0.0
    %601 = vmatprep.subr.mxu0 0.0
    %602 = vmatpush2.msra.mxu0 0.0
    %603 = vmatprep.subr.mxu0 0.0
    %604 = vmatpush2.msra.mxu0 0.0
    %605 = vmatprep.mubr.f32.mxu0 0.0
    %606 = vmatmul.mubr.f32.gmra.mxu0 %v539
    %v607 = vpop.f32.mrf.mxu0
    %v608 = vadd.f32 0.0, %v607
    %v609 = vpop.f32.mrf.mxu0
    %v610 = vadd.f32 0.0, %v609
    %611 = vdwg.mxu0
    %613 = vrot.lane.b32.xlu0 %v500, 32
    %v614 = vpop.permute.xlu0 %613
    %v615 = vsel %vm223, %v614, 0
    %617 = vmatprep.subr.mxu0 0.0
    %618 = vmatpush1.msra.mxu0 0.0
    %619 = vmatprep.subr.mxu0 0.0
    %620 = vmatpush1.msra.mxu0 0.0
    %621 = vmatprep.subr.mxu0 0.0
    %622 = vmatpush1.msra.mxu0 0.0
    %623 = vmatprep.subr.mxu0 0.0
    %624 = vmatpush1.msra.mxu0 0.0
    %625 = vmatprep.subr.mxu0 0.0
    %626 = vmatpush1.msra.mxu0 0.0
    %627 = vmatprep.subr.mxu0 0.0
    %628 = vmatpush1.msra.mxu0 0.0
    %629 = vmatprep.subr.mxu0 0.0
    %630 = vmatpush1.msra.mxu0 0.0
    %631 = vmatprep.subr.mxu0 0.0
    %632 = vmatpush1.msra.mxu0 0.0
    %633 = vmatprep.subr.mxu0 0.0
    %634 = vmatpush1.msra.mxu0 0.0
    %635 = vmatprep.subr.mxu0 0.0
    %636 = vmatpush1.msra.mxu0 0.0
    %637 = vmatprep.subr.mxu0 0.0
    %638 = vmatpush1.msra.mxu0 0.0
    %639 = vmatprep.subr.mxu0 0.0
    %640 = vmatpush1.msra.mxu0 0.0
    %641 = vmatprep.subr.mxu0 %v205
    %642 = vmatpush1.msra.mxu0 %v204
    %643 = vmatprep.subr.mxu0 %v203
    %644 = vmatpush1.msra.mxu0 %v202
    %645 = vmatprep.subr.mxu0 %v201
    %646 = vmatpush1.msra.mxu0 %v200
    %647 = vmatprep.subr.mxu0 %v199
    %648 = vmatpush1.msra.mxu0 %v198
    %649 = vmatprep.subr.mxu0 0.0
    %650 = vmatpush2.msra.mxu0 0.0
    %651 = vmatprep.subr.mxu0 0.0
    %652 = vmatpush2.msra.mxu0 0.0
    %653 = vmatprep.subr.mxu0 0.0
    %654 = vmatpush2.msra.mxu0 0.0
    %655 = vmatprep.subr.mxu0 0.0
    %656 = vmatpush2.msra.mxu0 0.0
    %657 = vmatprep.subr.mxu0 0.0
    %658 = vmatpush2.msra.mxu0 0.0
    %659 = vmatprep.subr.mxu0 0.0
    %660 = vmatpush2.msra.mxu0 0.0
    %661 = vmatprep.subr.mxu0 0.0
    %662 = vmatpush2.msra.mxu0 0.0
    %663 = vmatprep.subr.mxu0 0.0
    %664 = vmatpush2.msra.mxu0 0.0
    %665 = vmatprep.subr.mxu0 0.0
    %666 = vmatpush2.msra.mxu0 0.0
    %667 = vmatprep.subr.mxu0 0.0
    %668 = vmatpush2.msra.mxu0 0.0
    %669 = vmatprep.subr.mxu0 0.0
    %670 = vmatpush2.msra.mxu0 0.0
    %671 = vmatprep.subr.mxu0 0.0
    %672 = vmatpush2.msra.mxu0 0.0
    %673 = vmatprep.subr.mxu0 0.0
    %674 = vmatpush2.msra.mxu0 0.0
    %675 = vmatprep.subr.mxu0 0.0
    %676 = vmatpush2.msra.mxu0 0.0
    %677 = vmatprep.subr.mxu0 0.0
    %678 = vmatpush2.msra.mxu0 0.0
    %679 = vmatprep.subr.mxu0 0.0
    %680 = vmatpush2.msra.mxu0 0.0
    %681 = vmatprep.mubr.f32.mxu0 0.0
    %682 = vmatmul.mubr.f32.gmra.mxu0 %v615
    %v683 = vpop.f32.mrf.mxu0
    %v684 = vadd.f32 %v608, %v683
    %v685 = vpop.f32.mrf.mxu0
    %v686 = vadd.f32 %v610, %v685
    %687 = vdwg.mxu0
    %v688 = vadd.f32 %v684, %v170
    %v689 = vxor.u32 %v688, 2147483648
    %v690 = vmul.f32 %v689, 1.442695
    %v691 = vpow.pop %v690
    %v692 = vadd.f32 %v691, 1.0
    %v693 = vrcp.pop %v692
    %v694 = vmul.f32 1.0, %v693
    %v695 = vtanh.pop %v688
    %v696 = vmul.f32 %v694, %v494
    %698 = vrot.lane.b32.xlu0 %v695, 64
    %v699 = vpop.permute.xlu0 %698
    %v701 = vmul.f32 %v694, %v699
    %703 = vrot.lane.b32.xlu0 %v701, 32
    %v704 = vpop.permute.xlu0 %703
    %v706 = vadd.f32 %v696, %v704
    %v707 = vtanh.pop %v706
    %709 = vrot.lane.b32.xlu0 %v707, 64
    %v710 = vpop.permute.xlu0 %709
    %v712 = vmul.f32 %v694, %v710
    %v713 = vadd.f32 %v686, %v505
    %v714 = vxor.u32 %v713, 2147483648
    %v715 = vmul.f32 %v714, 1.442695
    %v716 = vpow.pop %v715
    %v717 = vadd.f32 %v716, 1.0
    %v718 = vrcp.pop %v717
    %v719 = vmul.f32 1.0, %v718
    %v720 = vtanh.pop %v713
    %v721 = vmul.f32 %v719, %v529
    %723 = vrot.lane.b32.xlu0 %v720, 64
    %v724 = vpop.permute.xlu0 %723
    %v726 = vmul.f32 %v719, %v724
    %728 = vrot.lane.b32.xlu0 %v726, 32
    %v729 = vpop.permute.xlu0 %728
    %v731 = vadd.f32 %v721, %v729
    %v732 = vtanh.pop %v731
    %734 = vrot.lane.b32.xlu0 %v732, 64
    %v735 = vpop.permute.xlu0 %734
    %v737 = vmul.f32 %v719, %v735
    %739 = vrot.lane.b32.xlu0 %v737, 32
    %v740 = vpop.permute.xlu0 %739
    %v741 = vsel %vm223, %v740, 0
    %743 = vmatprep.subr.mxu0 0.0
    %744 = vmatpush1.msra.mxu0 0.0
    %745 = vmatprep.subr.mxu0 0.0
    %746 = vmatpush1.msra.mxu0 0.0
    %747 = vmatprep.subr.mxu0 0.0
    %748 = vmatpush1.msra.mxu0 0.0
    %749 = vmatprep.subr.mxu0 0.0
    %750 = vmatpush1.msra.mxu0 0.0
    %751 = vmatprep.subr.mxu0 0.0
    %752 = vmatpush1.msra.mxu0 0.0
    %753 = vmatprep.subr.mxu0 0.0
    %754 = vmatpush1.msra.mxu0 0.0
    %755 = vmatprep.subr.mxu0 0.0
    %756 = vmatpush1.msra.mxu0 0.0
    %757 = vmatprep.subr.mxu0 0.0
    %758 = vmatpush1.msra.mxu0 0.0
    %759 = vmatprep.subr.mxu0 0.0
    %760 = vmatpush1.msra.mxu0 0.0
    %761 = vmatprep.subr.mxu0 0.0
    %762 = vmatpush1.msra.mxu0 0.0
    %763 = vmatprep.subr.mxu0 0.0
    %764 = vmatpush1.msra.mxu0 0.0
    %765 = vmatprep.subr.mxu0 0.0
    %766 = vmatpush1.msra.mxu0 0.0
    %767 = vmatprep.subr.mxu0 %v214
    %768 = vmatpush1.msra.mxu0 %v213
    %769 = vmatprep.subr.mxu0 %v212
    %770 = vmatpush1.msra.mxu0 %v211
    %771 = vmatprep.subr.mxu0 %v210
    %772 = vmatpush1.msra.mxu0 %v209
    %773 = vmatprep.subr.mxu0 %v208
    %774 = vmatpush1.msra.mxu0 %v207
    %775 = vmatprep.subr.mxu0 0.0
    %776 = vmatpush2.msra.mxu0 0.0
    %777 = vmatprep.subr.mxu0 0.0
    %778 = vmatpush2.msra.mxu0 0.0
    %779 = vmatprep.subr.mxu0 0.0
    %780 = vmatpush2.msra.mxu0 0.0
    %781 = vmatprep.subr.mxu0 0.0
    %782 = vmatpush2.msra.mxu0 0.0
    %783 = vmatprep.subr.mxu0 0.0
    %784 = vmatpush2.msra.mxu0 0.0
    %785 = vmatprep.subr.mxu0 0.0
    %786 = vmatpush2.msra.mxu0 0.0
    %787 = vmatprep.subr.mxu0 0.0
    %788 = vmatpush2.msra.mxu0 0.0
    %789 = vmatprep.subr.mxu0 0.0
    %790 = vmatpush2.msra.mxu0 0.0
    %791 = vmatprep.subr.mxu0 0.0
    %792 = vmatpush2.msra.mxu0 0.0
    %793 = vmatprep.subr.mxu0 0.0
    %794 = vmatpush2.msra.mxu0 0.0
    %795 = vmatprep.subr.mxu0 0.0
    %796 = vmatpush2.msra.mxu0 0.0
    %797 = vmatprep.subr.mxu0 0.0
    %798 = vmatpush2.msra.mxu0 0.0
    %799 = vmatprep.subr.mxu0 0.0
    %800 = vmatpush2.msra.mxu0 0.0
    %801 = vmatprep.subr.mxu0 0.0
    %802 = vmatpush2.msra.mxu0 0.0
    %803 = vmatprep.subr.mxu0 0.0
    %804 = vmatpush2.msra.mxu0 0.0
    %805 = vmatprep.subr.mxu0 0.0
    %806 = vmatpush2.msra.mxu0 0.0
    %807 = vmatprep.mubr.f32.mxu0 0.0
    %808 = vmatmul.mubr.f32.gmra.mxu0 %v741
    %v809 = vpop.f32.mrf.mxu0
    %v810 = vadd.f32 0.0, %v809
    %v811 = vpop.f32.mrf.mxu0
    %v812 = vadd.f32 0.0, %v811
    %813 = vdwg.mxu0
    %815 = vrot.lane.b32.xlu0 %v712, 32
    %v816 = vpop.permute.xlu0 %815
    %v817 = vsel %vm223, %v816, 0
    %819 = vmatprep.subr.mxu0 0.0
    %820 = vmatpush1.msra.mxu0 0.0
    %821 = vmatprep.subr.mxu0 0.0
    %822 = vmatpush1.msra.mxu0 0.0
    %823 = vmatprep.subr.mxu0 0.0
    %824 = vmatpush1.msra.mxu0 0.0
    %825 = vmatprep.subr.mxu0 0.0
    %826 = vmatpush1.msra.mxu0 0.0
    %827 = vmatprep.subr.mxu0 0.0
    %828 = vmatpush1.msra.mxu0 0.0
    %829 = vmatprep.subr.mxu0 0.0
    %830 = vmatpush1.msra.mxu0 0.0
    %831 = vmatprep.subr.mxu0 0.0
    %832 = vmatpush1.msra.mxu0 0.0
    %833 = vmatprep.subr.mxu0 0.0
    %834 = vmatpush1.msra.mxu0 0.0
    %835 = vmatprep.subr.mxu0 0.0
    %836 = vmatpush1.msra.mxu0 0.0
    %837 = vmatprep.subr.mxu0 0.0
    %838 = vmatpush1.msra.mxu0 0.0
    %839 = vmatprep.subr.mxu0 0.0
    %840 = vmatpush1.msra.mxu0 0.0
    %841 = vmatprep.subr.mxu0 0.0
    %842 = vmatpush1.msra.mxu0 0.0
    %843 = vmatprep.subr.mxu0 %v205
    %844 = vmatpush1.msra.mxu0 %v204
    %845 = vmatprep.subr.mxu0 %v203
    %846 = vmatpush1.msra.mxu0 %v202
    %847 = vmatprep.subr.mxu0 %v201
    %848 = vmatpush1.msra.mxu0 %v200
    %849 = vmatprep.subr.mxu0 %v199
    %850 = vmatpush1.msra.mxu0 %v198
    %851 = vmatprep.subr.mxu0 0.0
    %852 = vmatpush2.msra.mxu0 0.0
    %853 = vmatprep.subr.mxu0 0.0
    %854 = vmatpush2.msra.mxu0 0.0
    %855 = vmatprep.subr.mxu0 0.0
    %856 = vmatpush2.msra.mxu0 0.0
    %857 = vmatprep.subr.mxu0 0.0
    %858 = vmatpush2.msra.mxu0 0.0
    %859 = vmatprep.subr.mxu0 0.0
    %860 = vmatpush2.msra.mxu0 0.0
    %861 = vmatprep.subr.mxu0 0.0
    %862 = vmatpush2.msra.mxu0 0.0
    %863 = vmatprep.subr.mxu0 0.0
    %864 = vmatpush2.msra.mxu0 0.0
    %865 = vmatprep.subr.mxu0 0.0
    %866 = vmatpush2.msra.mxu0 0.0
    %867 = vmatprep.subr.mxu0 0.0
    %868 = vmatpush2.msra.mxu0 0.0
    %869 = vmatprep.subr.mxu0 0.0
    %870 = vmatpush2.msra.mxu0 0.0
    %871 = vmatprep.subr.mxu0 0.0
    %872 = vmatpush2.msra.mxu0 0.0
    %873 = vmatprep.subr.mxu0 0.0
    %874 = vmatpush2.msra.mxu0 0.0
    %875 = vmatprep.subr.mxu0 0.0
    %876 = vmatpush2.msra.mxu0 0.0
    %877 = vmatprep.subr.mxu0 0.0
    %878 = vmatpush2.msra.mxu0 0.0
    %879 = vmatprep.subr.mxu0 0.0
    %880 = vmatpush2.msra.mxu0 0.0
    %881 = vmatprep.subr.mxu0 0.0
    %882 = vmatpush2.msra.mxu0 0.0
    %883 = vmatprep.mubr.f32.mxu0 0.0
    %884 = vmatmul.mubr.f32.gmra.mxu0 %v817
    %v885 = vpop.f32.mrf.mxu0
    %v886 = vadd.f32 %v810, %v885
    %v887 = vpop.f32.mrf.mxu0
    %v888 = vadd.f32 %v812, %v887
    %889 = vdwg.mxu0
    %v890 = vadd.f32 %v886, %v175
    %v891 = vxor.u32 %v890, 2147483648
    %v892 = vmul.f32 %v891, 1.442695
    %v893 = vpow.pop %v892
    %v894 = vadd.f32 %v893, 1.0
    %v895 = vrcp.pop %v894
    %v896 = vmul.f32 1.0, %v895
    %v897 = vtanh.pop %v890
    %v898 = vmul.f32 %v896, %v706
    %900 = vrot.lane.b32.xlu0 %v897, 64
    %v901 = vpop.permute.xlu0 %900
    %v903 = vmul.f32 %v896, %v901
    %905 = vrot.lane.b32.xlu0 %v903, 32
    %v906 = vpop.permute.xlu0 %905
    %v908 = vadd.f32 %v898, %v906
    %v909 = vtanh.pop %v908
    %911 = vrot.lane.b32.xlu0 %v909, 64
    %v912 = vpop.permute.xlu0 %911
    %v914 = vmul.f32 %v896, %v912
    %v915 = vadd.f32 %v888, %v505
    %v916 = vxor.u32 %v915, 2147483648
    %v917 = vmul.f32 %v916, 1.442695
    %v918 = vpow.pop %v917
    %v919 = vadd.f32 %v918, 1.0
    %v920 = vrcp.pop %v919
    %v921 = vmul.f32 1.0, %v920
    %v922 = vtanh.pop %v915
    %v923 = vmul.f32 %v921, %v731
    %925 = vrot.lane.b32.xlu0 %v922, 64
    %v926 = vpop.permute.xlu0 %925
    %v928 = vmul.f32 %v921, %v926
    %930 = vrot.lane.b32.xlu0 %v928, 32
    %v931 = vpop.permute.xlu0 %930
    %v933 = vadd.f32 %v923, %v931
    %v934 = vtanh.pop %v933
    %936 = vrot.lane.b32.xlu0 %v934, 64
    %v937 = vpop.permute.xlu0 %936
    %v939 = vmul.f32 %v921, %v937
    %941 = vrot.lane.b32.xlu0 %v939, 32
    %v942 = vpop.permute.xlu0 %941
    %v943 = vsel %vm223, %v942, 0
    %945 = vmatprep.subr.mxu0 0.0
    %946 = vmatpush1.msra.mxu0 0.0
    %947 = vmatprep.subr.mxu0 0.0
    %948 = vmatpush1.msra.mxu0 0.0
    %949 = vmatprep.subr.mxu0 0.0
    %950 = vmatpush1.msra.mxu0 0.0
    %951 = vmatprep.subr.mxu0 0.0
    %952 = vmatpush1.msra.mxu0 0.0
    %953 = vmatprep.subr.mxu0 0.0
    %954 = vmatpush1.msra.mxu0 0.0
    %955 = vmatprep.subr.mxu0 0.0
    %956 = vmatpush1.msra.mxu0 0.0
    %957 = vmatprep.subr.mxu0 0.0
    %958 = vmatpush1.msra.mxu0 0.0
    %959 = vmatprep.subr.mxu0 0.0
    %960 = vmatpush1.msra.mxu0 0.0
    %961 = vmatprep.subr.mxu0 0.0
    %962 = vmatpush1.msra.mxu0 0.0
    %963 = vmatprep.subr.mxu0 0.0
    %964 = vmatpush1.msra.mxu0 0.0
    %965 = vmatprep.subr.mxu0 0.0
    %966 = vmatpush1.msra.mxu0 0.0
    %967 = vmatprep.subr.mxu0 0.0
    %968 = vmatpush1.msra.mxu0 0.0
    %969 = vmatprep.subr.mxu0 %v214
    %970 = vmatpush1.msra.mxu0 %v213
    %971 = vmatprep.subr.mxu0 %v212
    %972 = vmatpush1.msra.mxu0 %v211
    %973 = vmatprep.subr.mxu0 %v210
    %974 = vmatpush1.msra.mxu0 %v209
    %975 = vmatprep.subr.mxu0 %v208
    %976 = vmatpush1.msra.mxu0 %v207
    %977 = vmatprep.subr.mxu0 0.0
    %978 = vmatpush2.msra.mxu0 0.0
    %979 = vmatprep.subr.mxu0 0.0
    %980 = vmatpush2.msra.mxu0 0.0
    %981 = vmatprep.subr.mxu0 0.0
    %982 = vmatpush2.msra.mxu0 0.0
    %983 = vmatprep.subr.mxu0 0.0
    %984 = vmatpush2.msra.mxu0 0.0
    %985 = vmatprep.subr.mxu0 0.0
    %986 = vmatpush2.msra.mxu0 0.0
    %987 = vmatprep.subr.mxu0 0.0
    %988 = vmatpush2.msra.mxu0 0.0
    %989 = vmatprep.subr.mxu0 0.0
    %990 = vmatpush2.msra.mxu0 0.0
    %991 = vmatprep.subr.mxu0 0.0
    %992 = vmatpush2.msra.mxu0 0.0
    %993 = vmatprep.subr.mxu0 0.0
    %994 = vmatpush2.msra.mxu0 0.0
    %995 = vmatprep.subr.mxu0 0.0
    %996 = vmatpush2.msra.mxu0 0.0
    %997 = vmatprep.subr.mxu0 0.0
    %998 = vmatpush2.msra.mxu0 0.0
    %999 = vmatprep.subr.mxu0 0.0
    %1000 = vmatpush2.msra.mxu0 0.0
    %1001 = vmatprep.subr.mxu0 0.0
    %1002 = vmatpush2.msra.mxu0 0.0
    %1003 = vmatprep.subr.mxu0 0.0
    %1004 = vmatpush2.msra.mxu0 0.0
    %1005 = vmatprep.subr.mxu0 0.0
    %1006 = vmatpush2.msra.mxu0 0.0
    %1007 = vmatprep.subr.mxu0 0.0
    %1008 = vmatpush2.msra.mxu0 0.0
    %1009 = vmatprep.mubr.f32.mxu0 0.0
    %1010 = vmatmul.mubr.f32.gmra.mxu0 %v943
    %v1011 = vpop.f32.mrf.mxu0
    %v1012 = vadd.f32 0.0, %v1011
    %v1013 = vpop.f32.mrf.mxu0
    %v1014 = vadd.f32 0.0, %v1013
    %1015 = vdwg.mxu0
    %1017 = vrot.lane.b32.xlu0 %v914, 32
    %v1018 = vpop.permute.xlu0 %1017
    %v1019 = vsel %vm223, %v1018, 0
    %1021 = vmatprep.subr.mxu0 0.0
    %1022 = vmatpush1.msra.mxu0 0.0
    %1023 = vmatprep.subr.mxu0 0.0
    %1024 = vmatpush1.msra.mxu0 0.0
    %1025 = vmatprep.subr.mxu0 0.0
    %1026 = vmatpush1.msra.mxu0 0.0
    %1027 = vmatprep.subr.mxu0 0.0
    %1028 = vmatpush1.msra.mxu0 0.0
    %1029 = vmatprep.subr.mxu0 0.0
    %1030 = vmatpush1.msra.mxu0 0.0
    %1031 = vmatprep.subr.mxu0 0.0
    %1032 = vmatpush1.msra.mxu0 0.0
    %1033 = vmatprep.subr.mxu0 0.0
    %1034 = vmatpush1.msra.mxu0 0.0
    %1035 = vmatprep.subr.mxu0 0.0
    %1036 = vmatpush1.msra.mxu0 0.0
    %1037 = vmatprep.subr.mxu0 0.0
    %1038 = vmatpush1.msra.mxu0 0.0
    %1039 = vmatprep.subr.mxu0 0.0
    %1040 = vmatpush1.msra.mxu0 0.0
    %1041 = vmatprep.subr.mxu0 0.0
    %1042 = vmatpush1.msra.mxu0 0.0
    %1043 = vmatprep.subr.mxu0 0.0
    %1044 = vmatpush1.msra.mxu0 0.0
    %1045 = vmatprep.subr.mxu0 %v205
    %1046 = vmatpush1.msra.mxu0 %v204
    %1047 = vmatprep.subr.mxu0 %v203
    %1048 = vmatpush1.msra.mxu0 %v202
    %1049 = vmatprep.subr.mxu0 %v201
    %1050 = vmatpush1.msra.mxu0 %v200
    %1051 = vmatprep.subr.mxu0 %v199
    %1052 = vmatpush1.msra.mxu0 %v198
    %1053 = vmatprep.subr.mxu0 0.0
    %1054 = vmatpush2.msra.mxu0 0.0
    %1055 = vmatprep.subr.mxu0 0.0
    %1056 = vmatpush2.msra.mxu0 0.0
    %1057 = vmatprep.subr.mxu0 0.0
    %1058 = vmatpush2.msra.mxu0 0.0
    %1059 = vmatprep.subr.mxu0 0.0
    %1060 = vmatpush2.msra.mxu0 0.0
    %1061 = vmatprep.subr.mxu0 0.0
    %1062 = vmatpush2.msra.mxu0 0.0
    %1063 = vmatprep.subr.mxu0 0.0
    %1064 = vmatpush2.msra.mxu0 0.0
    %1065 = vmatprep.subr.mxu0 0.0
    %1066 = vmatpush2.msra.mxu0 0.0
    %1067 = vmatprep.subr.mxu0 0.0
    %1068 = vmatpush2.msra.mxu0 0.0
    %1069 = vmatprep.subr.mxu0 0.0
    %1070 = vmatpush2.msra.mxu0 0.0
    %1071 = vmatprep.subr.mxu0 0.0
    %1072 = vmatpush2.msra.mxu0 0.0
    %1073 = vmatprep.subr.mxu0 0.0
    %1074 = vmatpush2.msra.mxu0 0.0
    %1075 = vmatprep.subr.mxu0 0.0
    %1076 = vmatpush2.msra.mxu0 0.0
    %1077 = vmatprep.subr.mxu0 0.0
    %1078 = vmatpush2.msra.mxu0 0.0
    %1079 = vmatprep.subr.mxu0 0.0
    %1080 = vmatpush2.msra.mxu0 0.0
    %1081 = vmatprep.subr.mxu0 0.0
    %1082 = vmatpush2.msra.mxu0 0.0
    %1083 = vmatprep.subr.mxu0 0.0
    %1084 = vmatpush2.msra.mxu0 0.0
    %1085 = vmatprep.mubr.f32.mxu0 0.0
    %1086 = vmatmul.mubr.f32.gmra.mxu0 %v1019
    %v1087 = vpop.f32.mrf.mxu0
    %v1088 = vadd.f32 %v1012, %v1087
    %v1089 = vpop.f32.mrf.mxu0
    %v1090 = vadd.f32 %v1014, %v1089
    %1091 = vdwg.mxu0
    %v1092 = vadd.f32 %v1088, %v180
    %v1093 = vxor.u32 %v1092, 2147483648
    %v1094 = vmul.f32 %v1093, 1.442695
    %v1095 = vpow.pop %v1094
    %v1096 = vadd.f32 %v1095, 1.0
    %v1097 = vrcp.pop %v1096
    %v1098 = vmul.f32 1.0, %v1097
    %v1099 = vtanh.pop %v1092
    %v1100 = vmul.f32 %v1098, %v908
    %1102 = vrot.lane.b32.xlu0 %v1099, 64
    %v1103 = vpop.permute.xlu0 %1102
    %v1105 = vmul.f32 %v1098, %v1103
    %1107 = vrot.lane.b32.xlu0 %v1105, 32
    %v1108 = vpop.permute.xlu0 %1107
    %v1110 = vadd.f32 %v1100, %v1108
    %v1111 = vtanh.pop %v1110
    %1113 = vrot.lane.b32.xlu0 %v1111, 64
    %v1114 = vpop.permute.xlu0 %1113
    %v1116 = vmul.f32 %v1098, %v1114
    %v1117 = vadd.f32 %v1090, %v505
    %v1118 = vxor.u32 %v1117, 2147483648
    %v1119 = vmul.f32 %v1118, 1.442695
    %v1120 = vpow.pop %v1119
    %v1121 = vadd.f32 %v1120, 1.0
    %v1122 = vrcp.pop %v1121
    %v1123 = vmul.f32 1.0, %v1122
    %v1124 = vtanh.pop %v1117
    %v1125 = vmul.f32 %v1123, %v933
    %1127 = vrot.lane.b32.xlu0 %v1124, 64
    %v1128 = vpop.permute.xlu0 %1127
    %v1130 = vmul.f32 %v1123, %v1128
    %1132 = vrot.lane.b32.xlu0 %v1130, 32
    %v1133 = vpop.permute.xlu0 %1132
    %v1135 = vadd.f32 %v1125, %v1133
    %v1136 = vtanh.pop %v1135
    %1138 = vrot.lane.b32.xlu0 %v1136, 64
    %v1139 = vpop.permute.xlu0 %1138
    %v1141 = vmul.f32 %v1123, %v1139
    %1143 = vrot.lane.b32.xlu0 %v1141, 32
    %v1144 = vpop.permute.xlu0 %1143
    %v1145 = vsel %vm223, %v1144, 0
    %1147 = vmatprep.subr.mxu0 0.0
    %1148 = vmatpush1.msra.mxu0 0.0
    %1149 = vmatprep.subr.mxu0 0.0
    %1150 = vmatpush1.msra.mxu0 0.0
    %1151 = vmatprep.subr.mxu0 0.0
    %1152 = vmatpush1.msra.mxu0 0.0
    %1153 = vmatprep.subr.mxu0 0.0
    %1154 = vmatpush1.msra.mxu0 0.0
    %1155 = vmatprep.subr.mxu0 0.0
    %1156 = vmatpush1.msra.mxu0 0.0
    %1157 = vmatprep.subr.mxu0 0.0
    %1158 = vmatpush1.msra.mxu0 0.0
    %1159 = vmatprep.subr.mxu0 0.0
    %1160 = vmatpush1.msra.mxu0 0.0
    %1161 = vmatprep.subr.mxu0 0.0
    %1162 = vmatpush1.msra.mxu0 0.0
    %1163 = vmatprep.subr.mxu0 0.0
    %1164 = vmatpush1.msra.mxu0 0.0
    %1165 = vmatprep.subr.mxu0 0.0
    %1166 = vmatpush1.msra.mxu0 0.0
    %1167 = vmatprep.subr.mxu0 0.0
    %1168 = vmatpush1.msra.mxu0 0.0
    %1169 = vmatprep.subr.mxu0 0.0
    %1170 = vmatpush1.msra.mxu0 0.0
    %1171 = vmatprep.subr.mxu0 %v214
    %1172 = vmatpush1.msra.mxu0 %v213
    %1173 = vmatprep.subr.mxu0 %v212
    %1174 = vmatpush1.msra.mxu0 %v211
    %1175 = vmatprep.subr.mxu0 %v210
    %1176 = vmatpush1.msra.mxu0 %v209
    %1177 = vmatprep.subr.mxu0 %v208
    %1178 = vmatpush1.msra.mxu0 %v207
    %1179 = vmatprep.subr.mxu0 0.0
    %1180 = vmatpush2.msra.mxu0 0.0
    %1181 = vmatprep.subr.mxu0 0.0
    %1182 = vmatpush2.msra.mxu0 0.0
    %1183 = vmatprep.subr.mxu0 0.0
    %1184 = vmatpush2.msra.mxu0 0.0
    %1185 = vmatprep.subr.mxu0 0.0
    %1186 = vmatpush2.msra.mxu0 0.0
    %1187 = vmatprep.subr.mxu0 0.0
    %1188 = vmatpush2.msra.mxu0 0.0
    %1189 = vmatprep.subr.mxu0 0.0
    %1190 = vmatpush2.msra.mxu0 0.0
    %1191 = vmatprep.subr.mxu0 0.0
    %1192 = vmatpush2.msra.mxu0 0.0
    %1193 = vmatprep.subr.mxu0 0.0
    %1194 = vmatpush2.msra.mxu0 0.0
    %1195 = vmatprep.subr.mxu0 0.0
    %1196 = vmatpush2.msra.mxu0 0.0
    %1197 = vmatprep.subr.mxu0 0.0
    %1198 = vmatpush2.msra.mxu0 0.0
    %1199 = vmatprep.subr.mxu0 0.0
    %1200 = vmatpush2.msra.mxu0 0.0
    %1201 = vmatprep.subr.mxu0 0.0
    %1202 = vmatpush2.msra.mxu0 0.0
    %1203 = vmatprep.subr.mxu0 0.0
    %1204 = vmatpush2.msra.mxu0 0.0
    %1205 = vmatprep.subr.mxu0 0.0
    %1206 = vmatpush2.msra.mxu0 0.0
    %1207 = vmatprep.subr.mxu0 0.0
    %1208 = vmatpush2.msra.mxu0 0.0
    %1209 = vmatprep.subr.mxu0 0.0
    %1210 = vmatpush2.msra.mxu0 0.0
    %1211 = vmatprep.mubr.f32.mxu0 0.0
    %1212 = vmatmul.mubr.f32.gmra.mxu0 %v1145
    %v1213 = vpop.f32.mrf.mxu0
    %v1214 = vadd.f32 0.0, %v1213
    %v1215 = vpop.f32.mrf.mxu0
    %v1216 = vadd.f32 0.0, %v1215
    %1217 = vdwg.mxu0
    %1219 = vrot.lane.b32.xlu0 %v1116, 32
    %v1220 = vpop.permute.xlu0 %1219
    %v1221 = vsel %vm223, %v1220, 0
    %1223 = vmatprep.subr.mxu0 0.0
    %1224 = vmatpush1.msra.mxu0 0.0
    %1225 = vmatprep.subr.mxu0 0.0
    %1226 = vmatpush1.msra.mxu0 0.0
    %1227 = vmatprep.subr.mxu0 0.0
    %1228 = vmatpush1.msra.mxu0 0.0
    %1229 = vmatprep.subr.mxu0 0.0
    %1230 = vmatpush1.msra.mxu0 0.0
    %1231 = vmatprep.subr.mxu0 0.0
    %1232 = vmatpush1.msra.mxu0 0.0
    %1233 = vmatprep.subr.mxu0 0.0
    %1234 = vmatpush1.msra.mxu0 0.0
    %1235 = vmatprep.subr.mxu0 0.0
    %1236 = vmatpush1.msra.mxu0 0.0
    %1237 = vmatprep.subr.mxu0 0.0
    %1238 = vmatpush1.msra.mxu0 0.0
    %1239 = vmatprep.subr.mxu0 0.0
    %1240 = vmatpush1.msra.mxu0 0.0
    %1241 = vmatprep.subr.mxu0 0.0
    %1242 = vmatpush1.msra.mxu0 0.0
    %1243 = vmatprep.subr.mxu0 0.0
    %1244 = vmatpush1.msra.mxu0 0.0
    %1245 = vmatprep.subr.mxu0 0.0
    %1246 = vmatpush1.msra.mxu0 0.0
    %1247 = vmatprep.subr.mxu0 %v205
    %1248 = vmatpush1.msra.mxu0 %v204
    %1249 = vmatprep.subr.mxu0 %v203
    %1250 = vmatpush1.msra.mxu0 %v202
    %1251 = vmatprep.subr.mxu0 %v201
    %1252 = vmatpush1.msra.mxu0 %v200
    %1253 = vmatprep.subr.mxu0 %v199
    %1254 = vmatpush1.msra.mxu0 %v198
    %1255 = vmatprep.subr.mxu0 0.0
    %1256 = vmatpush2.msra.mxu0 0.0
    %1257 = vmatprep.subr.mxu0 0.0
    %1258 = vmatpush2.msra.mxu0 0.0
    %1259 = vmatprep.subr.mxu0 0.0
    %1260 = vmatpush2.msra.mxu0 0.0
    %1261 = vmatprep.subr.mxu0 0.0
    %1262 = vmatpush2.msra.mxu0 0.0
    %1263 = vmatprep.subr.mxu0 0.0
    %1264 = vmatpush2.msra.mxu0 0.0
    %1265 = vmatprep.subr.mxu0 0.0
    %1266 = vmatpush2.msra.mxu0 0.0
    %1267 = vmatprep.subr.mxu0 0.0
    %1268 = vmatpush2.msra.mxu0 0.0
    %1269 = vmatprep.subr.mxu0 0.0
    %1270 = vmatpush2.msra.mxu0 0.0
    %1271 = vmatprep.subr.mxu0 0.0
    %1272 = vmatpush2.msra.mxu0 0.0
    %1273 = vmatprep.subr.mxu0 0.0
    %1274 = vmatpush2.msra.mxu0 0.0
    %1275 = vmatprep.subr.mxu0 0.0
    %1276 = vmatpush2.msra.mxu0 0.0
    %1277 = vmatprep.subr.mxu0 0.0
    %1278 = vmatpush2.msra.mxu0 0.0
    %1279 = vmatprep.subr.mxu0 0.0
    %1280 = vmatpush2.msra.mxu0 0.0
    %1281 = vmatprep.subr.mxu0 0.0
    %1282 = vmatpush2.msra.mxu0 0.0
    %1283 = vmatprep.subr.mxu0 0.0
    %1284 = vmatpush2.msra.mxu0 0.0
    %1285 = vmatprep.subr.mxu0 0.0
    %1286 = vmatpush2.msra.mxu0 0.0
    %1287 = vmatprep.mubr.f32.mxu0 0.0
    %1288 = vmatmul.mubr.f32.gmra.mxu0 %v1221
    %v1289 = vpop.f32.mrf.mxu0
    %v1290 = vadd.f32 %v1214, %v1289
    %v1291 = vpop.f32.mrf.mxu0
    %v1292 = vadd.f32 %v1216, %v1291
    %1293 = vdwg.mxu0
    %v1294 = vadd.f32 %v1290, %v185
    %v1295 = vxor.u32 %v1294, 2147483648
    %v1296 = vmul.f32 %v1295, 1.442695
    %v1297 = vpow.pop %v1296
    %v1298 = vadd.f32 %v1297, 1.0
    %v1299 = vrcp.pop %v1298
    %v1300 = vmul.f32 1.0, %v1299
    %v1301 = vtanh.pop %v1294
    %v1302 = vmul.f32 %v1300, %v1110
    %1304 = vrot.lane.b32.xlu0 %v1301, 64
    %v1305 = vpop.permute.xlu0 %1304
    %v1307 = vmul.f32 %v1300, %v1305
    %1309 = vrot.lane.b32.xlu0 %v1307, 32
    %v1310 = vpop.permute.xlu0 %1309
    %v1312 = vadd.f32 %v1302, %v1310
    %v1313 = vtanh.pop %v1312
    %1315 = vrot.lane.b32.xlu0 %v1313, 64
    %v1316 = vpop.permute.xlu0 %1315
    %v1318 = vmul.f32 %v1300, %v1316
    %v1319 = vadd.f32 %v1292, %v505
    %v1320 = vxor.u32 %v1319, 2147483648
    %v1321 = vmul.f32 %v1320, 1.442695
    %v1322 = vpow.pop %v1321
    %v1323 = vadd.f32 %v1322, 1.0
    %v1324 = vrcp.pop %v1323
    %v1325 = vmul.f32 1.0, %v1324
    %v1326 = vtanh.pop %v1319
    %v1327 = vmul.f32 %v1325, %v1135
    %1329 = vrot.lane.b32.xlu0 %v1326, 64
    %v1330 = vpop.permute.xlu0 %1329
    %v1332 = vmul.f32 %v1325, %v1330
    %1334 = vrot.lane.b32.xlu0 %v1332, 32
    %v1335 = vpop.permute.xlu0 %1334
    %v1337 = vadd.f32 %v1327, %v1335
    %v1338 = vtanh.pop %v1337
    %1340 = vrot.lane.b32.xlu0 %v1338, 64
    %v1341 = vpop.permute.xlu0 %1340
    %v1343 = vmul.f32 %v1325, %v1341
    %1345 = vrot.lane.b32.xlu0 %v1343, 32
    %v1346 = vpop.permute.xlu0 %1345
    %v1347 = vsel %vm223, %v1346, 0
    %1349 = vmatprep.subr.mxu0 0.0
    %1350 = vmatpush1.msra.mxu0 0.0
    %1351 = vmatprep.subr.mxu0 0.0
    %1352 = vmatpush1.msra.mxu0 0.0
    %1353 = vmatprep.subr.mxu0 0.0
    %1354 = vmatpush1.msra.mxu0 0.0
    %1355 = vmatprep.subr.mxu0 0.0
    %1356 = vmatpush1.msra.mxu0 0.0
    %1357 = vmatprep.subr.mxu0 0.0
    %1358 = vmatpush1.msra.mxu0 0.0
    %1359 = vmatprep.subr.mxu0 0.0
    %1360 = vmatpush1.msra.mxu0 0.0
    %1361 = vmatprep.subr.mxu0 0.0
    %1362 = vmatpush1.msra.mxu0 0.0
    %1363 = vmatprep.subr.mxu0 0.0
    %1364 = vmatpush1.msra.mxu0 0.0
    %1365 = vmatprep.subr.mxu0 0.0
    %1366 = vmatpush1.msra.mxu0 0.0
    %1367 = vmatprep.subr.mxu0 0.0
    %1368 = vmatpush1.msra.mxu0 0.0
    %1369 = vmatprep.subr.mxu0 0.0
    %1370 = vmatpush1.msra.mxu0 0.0
    %1371 = vmatprep.subr.mxu0 0.0
    %1372 = vmatpush1.msra.mxu0 0.0
    %1373 = vmatprep.subr.mxu0 %v214
    %1374 = vmatpush1.msra.mxu0 %v213
    %1375 = vmatprep.subr.mxu0 %v212
    %1376 = vmatpush1.msra.mxu0 %v211
    %1377 = vmatprep.subr.mxu0 %v210
    %1378 = vmatpush1.msra.mxu0 %v209
    %1379 = vmatprep.subr.mxu0 %v208
    %1380 = vmatpush1.msra.mxu0 %v207
    %1381 = vmatprep.subr.mxu0 0.0
    %1382 = vmatpush2.msra.mxu0 0.0
    %1383 = vmatprep.subr.mxu0 0.0
    %1384 = vmatpush2.msra.mxu0 0.0
    %1385 = vmatprep.subr.mxu0 0.0
    %1386 = vmatpush2.msra.mxu0 0.0
    %1387 = vmatprep.subr.mxu0 0.0
    %1388 = vmatpush2.msra.mxu0 0.0
    %1389 = vmatprep.subr.mxu0 0.0
    %1390 = vmatpush2.msra.mxu0 0.0
    %1391 = vmatprep.subr.mxu0 0.0
    %1392 = vmatpush2.msra.mxu0 0.0
    %1393 = vmatprep.subr.mxu0 0.0
    %1394 = vmatpush2.msra.mxu0 0.0
    %1395 = vmatprep.subr.mxu0 0.0
    %1396 = vmatpush2.msra.mxu0 0.0
    %1397 = vmatprep.subr.mxu0 0.0
    %1398 = vmatpush2.msra.mxu0 0.0
    %1399 = vmatprep.subr.mxu0 0.0
    %1400 = vmatpush2.msra.mxu0 0.0
    %1401 = vmatprep.subr.mxu0 0.0
    %1402 = vmatpush2.msra.mxu0 0.0
    %1403 = vmatprep.subr.mxu0 0.0
    %1404 = vmatpush2.msra.mxu0 0.0
    %1405 = vmatprep.subr.mxu0 0.0
    %1406 = vmatpush2.msra.mxu0 0.0
    %1407 = vmatprep.subr.mxu0 0.0
    %1408 = vmatpush2.msra.mxu0 0.0
    %1409 = vmatprep.subr.mxu0 0.0
    %1410 = vmatpush2.msra.mxu0 0.0
    %1411 = vmatprep.subr.mxu0 0.0
    %1412 = vmatpush2.msra.mxu0 0.0
    %1413 = vmatprep.mubr.f32.mxu0 0.0
    %1414 = vmatmul.mubr.f32.gmra.mxu0 %v1347
    %v1415 = vpop.f32.mrf.mxu0
    %v1416 = vadd.f32 0.0, %v1415
    %v1417 = vpop.f32.mrf.mxu0
    %v1418 = vadd.f32 0.0, %v1417
    %1419 = vdwg.mxu0
    %1421 = vrot.lane.b32.xlu0 %v1318, 32
    %v1422 = vpop.permute.xlu0 %1421
    %v1423 = vsel %vm223, %v1422, 0
    %1425 = vmatprep.subr.mxu0 0.0
    %1426 = vmatpush1.msra.mxu0 0.0
    %1427 = vmatprep.subr.mxu0 0.0
    %1428 = vmatpush1.msra.mxu0 0.0
    %1429 = vmatprep.subr.mxu0 0.0
    %1430 = vmatpush1.msra.mxu0 0.0
    %1431 = vmatprep.subr.mxu0 0.0
    %1432 = vmatpush1.msra.mxu0 0.0
    %1433 = vmatprep.subr.mxu0 0.0
    %1434 = vmatpush1.msra.mxu0 0.0
    %1435 = vmatprep.subr.mxu0 0.0
    %1436 = vmatpush1.msra.mxu0 0.0
    %1437 = vmatprep.subr.mxu0 0.0
    %1438 = vmatpush1.msra.mxu0 0.0
    %1439 = vmatprep.subr.mxu0 0.0
    %1440 = vmatpush1.msra.mxu0 0.0
    %1441 = vmatprep.subr.mxu0 0.0
    %1442 = vmatpush1.msra.mxu0 0.0
    %1443 = vmatprep.subr.mxu0 0.0
    %1444 = vmatpush1.msra.mxu0 0.0
    %1445 = vmatprep.subr.mxu0 0.0
    %1446 = vmatpush1.msra.mxu0 0.0
    %1447 = vmatprep.subr.mxu0 0.0
    %1448 = vmatpush1.msra.mxu0 0.0
    %1449 = vmatprep.subr.mxu0 %v205
    %1450 = vmatpush1.msra.mxu0 %v204
    %1451 = vmatprep.subr.mxu0 %v203
    %1452 = vmatpush1.msra.mxu0 %v202
    %1453 = vmatprep.subr.mxu0 %v201
    %1454 = vmatpush1.msra.mxu0 %v200
    %1455 = vmatprep.subr.mxu0 %v199
    %1456 = vmatpush1.msra.mxu0 %v198
    %1457 = vmatprep.subr.mxu0 0.0
    %1458 = vmatpush2.msra.mxu0 0.0
    %1459 = vmatprep.subr.mxu0 0.0
    %1460 = vmatpush2.msra.mxu0 0.0
    %1461 = vmatprep.subr.mxu0 0.0
    %1462 = vmatpush2.msra.mxu0 0.0
    %1463 = vmatprep.subr.mxu0 0.0
    %1464 = vmatpush2.msra.mxu0 0.0
    %1465 = vmatprep.subr.mxu0 0.0
    %1466 = vmatpush2.msra.mxu0 0.0
    %1467 = vmatprep.subr.mxu0 0.0
    %1468 = vmatpush2.msra.mxu0 0.0
    %1469 = vmatprep.subr.mxu0 0.0
    %1470 = vmatpush2.msra.mxu0 0.0
    %1471 = vmatprep.subr.mxu0 0.0
    %1472 = vmatpush2.msra.mxu0 0.0
    %1473 = vmatprep.subr.mxu0 0.0
    %1474 = vmatpush2.msra.mxu0 0.0
    %1475 = vmatprep.subr.mxu0 0.0
    %1476 = vmatpush2.msra.mxu0 0.0
    %1477 = vmatprep.subr.mxu0 0.0
    %1478 = vmatpush2.msra.mxu0 0.0
    %1479 = vmatprep.subr.mxu0 0.0
    %1480 = vmatpush2.msra.mxu0 0.0
    %1481 = vmatprep.subr.mxu0 0.0
    %1482 = vmatpush2.msra.mxu0 0.0
    %1483 = vmatprep.subr.mxu0 0.0
    %1484 = vmatpush2.msra.mxu0 0.0
    %1485 = vmatprep.subr.mxu0 0.0
    %1486 = vmatpush2.msra.mxu0 0.0
    %1487 = vmatprep.subr.mxu0 0.0
    %1488 = vmatpush2.msra.mxu0 0.0
    %1489 = vmatprep.mubr.f32.mxu0 0.0
    %1490 = vmatmul.mubr.f32.gmra.mxu0 %v1423
    %v1491 = vpop.f32.mrf.mxu0
    %v1492 = vadd.f32 %v1416, %v1491
    %v1493 = vpop.f32.mrf.mxu0
    %v1494 = vadd.f32 %v1418, %v1493
    %1495 = vdwg.mxu0
    %v1496 = vadd.f32 %v1492, %v190
    %v1497 = vxor.u32 %v1496, 2147483648
    %v1498 = vmul.f32 %v1497, 1.442695
    %v1499 = vpow.pop %v1498
    %v1500 = vadd.f32 %v1499, 1.0
    %v1501 = vrcp.pop %v1500
    %v1502 = vmul.f32 1.0, %v1501
    %v1503 = vtanh.pop %v1496
    %v1504 = vmul.f32 %v1502, %v1312
    %1506 = vrot.lane.b32.xlu0 %v1503, 64
    %v1507 = vpop.permute.xlu0 %1506
    %v1509 = vmul.f32 %v1502, %v1507
    %1511 = vrot.lane.b32.xlu0 %v1509, 32
    %v1512 = vpop.permute.xlu0 %1511
    %v1514 = vadd.f32 %v1504, %v1512
    %v1515 = vtanh.pop %v1514
    %1517 = vrot.lane.b32.xlu0 %v1515, 64
    %v1518 = vpop.permute.xlu0 %1517
    %v1520 = vmul.f32 %v1502, %v1518
    %v1521 = vadd.f32 %v1494, %v505
    %v1522 = vxor.u32 %v1521, 2147483648
    %v1523 = vmul.f32 %v1522, 1.442695
    %v1524 = vpow.pop %v1523
    %v1525 = vadd.f32 %v1524, 1.0
    %v1526 = vrcp.pop %v1525
    %v1527 = vmul.f32 1.0, %v1526
    %v1528 = vtanh.pop %v1521
    %v1529 = vmul.f32 %v1527, %v1337
    %1531 = vrot.lane.b32.xlu0 %v1528, 64
    %v1532 = vpop.permute.xlu0 %1531
    %v1534 = vmul.f32 %v1527, %v1532
    %1536 = vrot.lane.b32.xlu0 %v1534, 32
    %v1537 = vpop.permute.xlu0 %1536
    %v1539 = vadd.f32 %v1529, %v1537
    %v1540 = vtanh.pop %v1539
    %1542 = vrot.lane.b32.xlu0 %v1540, 64
    %v1543 = vpop.permute.xlu0 %1542
    %v1545 = vmul.f32 %v1527, %v1543
    %1547 = vrot.lane.b32.xlu0 %v1545, 32
    %v1548 = vpop.permute.xlu0 %1547
    %v1549 = vsel %vm223, %v1548, 0
    %1551 = vmatprep.subr.mxu0 0.0
    %1552 = vmatpush1.msra.mxu0 0.0
    %1553 = vmatprep.subr.mxu0 0.0
    %1554 = vmatpush1.msra.mxu0 0.0
    %1555 = vmatprep.subr.mxu0 0.0
    %1556 = vmatpush1.msra.mxu0 0.0
    %1557 = vmatprep.subr.mxu0 0.0
    %1558 = vmatpush1.msra.mxu0 0.0
    %1559 = vmatprep.subr.mxu0 0.0
    %1560 = vmatpush1.msra.mxu0 0.0
    %1561 = vmatprep.subr.mxu0 0.0
    %1562 = vmatpush1.msra.mxu0 0.0
    %1563 = vmatprep.subr.mxu0 0.0
    %1564 = vmatpush1.msra.mxu0 0.0
    %1565 = vmatprep.subr.mxu0 0.0
    %1566 = vmatpush1.msra.mxu0 0.0
    %1567 = vmatprep.subr.mxu0 0.0
    %1568 = vmatpush1.msra.mxu0 0.0
    %1569 = vmatprep.subr.mxu0 0.0
    %1570 = vmatpush1.msra.mxu0 0.0
    %1571 = vmatprep.subr.mxu0 0.0
    %1572 = vmatpush1.msra.mxu0 0.0
    %1573 = vmatprep.subr.mxu0 0.0
    %1574 = vmatpush1.msra.mxu0 0.0
    %1575 = vmatprep.subr.mxu0 %v214
    %1576 = vmatpush1.msra.mxu0 %v213
    %1577 = vmatprep.subr.mxu0 %v212
    %1578 = vmatpush1.msra.mxu0 %v211
    %1579 = vmatprep.subr.mxu0 %v210
    %1580 = vmatpush1.msra.mxu0 %v209
    %1581 = vmatprep.subr.mxu0 %v208
    %1582 = vmatpush1.msra.mxu0 %v207
    %1583 = vmatprep.subr.mxu0 0.0
    %1584 = vmatpush2.msra.mxu0 0.0
    %1585 = vmatprep.subr.mxu0 0.0
    %1586 = vmatpush2.msra.mxu0 0.0
    %1587 = vmatprep.subr.mxu0 0.0
    %1588 = vmatpush2.msra.mxu0 0.0
    %1589 = vmatprep.subr.mxu0 0.0
    %1590 = vmatpush2.msra.mxu0 0.0
    %1591 = vmatprep.subr.mxu0 0.0
    %1592 = vmatpush2.msra.mxu0 0.0
    %1593 = vmatprep.subr.mxu0 0.0
    %1594 = vmatpush2.msra.mxu0 0.0
    %1595 = vmatprep.subr.mxu0 0.0
    %1596 = vmatpush2.msra.mxu0 0.0
    %1597 = vmatprep.subr.mxu0 0.0
    %1598 = vmatpush2.msra.mxu0 0.0
    %1599 = vmatprep.subr.mxu0 0.0
    %1600 = vmatpush2.msra.mxu0 0.0
    %1601 = vmatprep.subr.mxu0 0.0
    %1602 = vmatpush2.msra.mxu0 0.0
    %1603 = vmatprep.subr.mxu0 0.0
    %1604 = vmatpush2.msra.mxu0 0.0
    %1605 = vmatprep.subr.mxu0 0.0
    %1606 = vmatpush2.msra.mxu0 0.0
    %1607 = vmatprep.subr.mxu0 0.0
    %1608 = vmatpush2.msra.mxu0 0.0
    %1609 = vmatprep.subr.mxu0 0.0
    %1610 = vmatpush2.msra.mxu0 0.0
    %1611 = vmatprep.subr.mxu0 0.0
    %1612 = vmatpush2.msra.mxu0 0.0
    %1613 = vmatprep.subr.mxu0 0.0
    %1614 = vmatpush2.msra.mxu0 0.0
    %1615 = vmatprep.mubr.f32.mxu0 0.0
    %1616 = vmatmul.mubr.f32.gmra.mxu0 %v1549
    %v1617 = vpop.f32.mrf.mxu0
    %v1618 = vadd.f32 0.0, %v1617
    %v1619 = vpop.f32.mrf.mxu0
    %v1620 = vadd.f32 0.0, %v1619
    %1621 = vdwg.mxu0
    %1623 = vrot.lane.b32.xlu0 %v1520, 32
    %v1624 = vpop.permute.xlu0 %1623
    %v1625 = vsel %vm223, %v1624, 0
    %1627 = vmatprep.subr.mxu0 0.0
    %1628 = vmatpush1.msra.mxu0 0.0
    %1629 = vmatprep.subr.mxu0 0.0
    %1630 = vmatpush1.msra.mxu0 0.0
    %1631 = vmatprep.subr.mxu0 0.0
    %1632 = vmatpush1.msra.mxu0 0.0
    %1633 = vmatprep.subr.mxu0 0.0
    %1634 = vmatpush1.msra.mxu0 0.0
    %1635 = vmatprep.subr.mxu0 0.0
    %1636 = vmatpush1.msra.mxu0 0.0
    %1637 = vmatprep.subr.mxu0 0.0
    %1638 = vmatpush1.msra.mxu0 0.0
    %1639 = vmatprep.subr.mxu0 0.0
    %1640 = vmatpush1.msra.mxu0 0.0
    %1641 = vmatprep.subr.mxu0 0.0
    %1642 = vmatpush1.msra.mxu0 0.0
    %1643 = vmatprep.subr.mxu0 0.0
    %1644 = vmatpush1.msra.mxu0 0.0
    %1645 = vmatprep.subr.mxu0 0.0
    %1646 = vmatpush1.msra.mxu0 0.0
    %1647 = vmatprep.subr.mxu0 0.0
    %1648 = vmatpush1.msra.mxu0 0.0
    %1649 = vmatprep.subr.mxu0 0.0
    %1650 = vmatpush1.msra.mxu0 0.0
    %1651 = vmatprep.subr.mxu0 %v205
    %1652 = vmatpush1.msra.mxu0 %v204
    %1653 = vmatprep.subr.mxu0 %v203
    %1654 = vmatpush1.msra.mxu0 %v202
    %1655 = vmatprep.subr.mxu0 %v201
    %1656 = vmatpush1.msra.mxu0 %v200
    %1657 = vmatprep.subr.mxu0 %v199
    %1658 = vmatpush1.msra.mxu0 %v198
    %1659 = vmatprep.subr.mxu0 0.0
    %1660 = vmatpush2.msra.mxu0 0.0
    %1661 = vmatprep.subr.mxu0 0.0
    %1662 = vmatpush2.msra.mxu0 0.0
    %1663 = vmatprep.subr.mxu0 0.0
    %1664 = vmatpush2.msra.mxu0 0.0
    %1665 = vmatprep.subr.mxu0 0.0
    %1666 = vmatpush2.msra.mxu0 0.0
    %1667 = vmatprep.subr.mxu0 0.0
    %1668 = vmatpush2.msra.mxu0 0.0
    %1669 = vmatprep.subr.mxu0 0.0
    %1670 = vmatpush2.msra.mxu0 0.0
    %1671 = vmatprep.subr.mxu0 0.0
    %1672 = vmatpush2.msra.mxu0 0.0
    %1673 = vmatprep.subr.mxu0 0.0
    %1674 = vmatpush2.msra.mxu0 0.0
    %1675 = vmatprep.subr.mxu0 0.0
    %1676 = vmatpush2.msra.mxu0 0.0
    %1677 = vmatprep.subr.mxu0 0.0
    %1678 = vmatpush2.msra.mxu0 0.0
    %1679 = vmatprep.subr.mxu0 0.0
    %1680 = vmatpush2.msra.mxu0 0.0
    %1681 = vmatprep.subr.mxu0 0.0
    %1682 = vmatpush2.msra.mxu0 0.0
    %1683 = vmatprep.subr.mxu0 0.0
    %1684 = vmatpush2.msra.mxu0 0.0
    %1685 = vmatprep.subr.mxu0 0.0
    %1686 = vmatpush2.msra.mxu0 0.0
    %1687 = vmatprep.subr.mxu0 0.0
    %1688 = vmatpush2.msra.mxu0 0.0
    %1689 = vmatprep.subr.mxu0 0.0
    %1690 = vmatpush2.msra.mxu0 0.0
    %1691 = vmatprep.mubr.f32.mxu0 0.0
    %1692 = vmatmul.mubr.f32.gmra.mxu0 %v1625
    %v1693 = vpop.f32.mrf.mxu0
    %v1694 = vadd.f32 %v1618, %v1693
    %v1695 = vpop.f32.mrf.mxu0
    %v1696 = vadd.f32 %v1620, %v1695
    %1697 = vdwg.mxu0
    %v1698 = vadd.f32 %v1694, %v195
    %v1699 = vxor.u32 %v1698, 2147483648
    %v1700 = vmul.f32 %v1699, 1.442695
    %v1701 = vpow.pop %v1700
    %v1702 = vadd.f32 %v1701, 1.0
    %v1703 = vrcp.pop %v1702
    %v1704 = vmul.f32 1.0, %v1703
    %v1705 = vtanh.pop %v1698
    %v1706 = vmul.f32 %v1704, %v1514
    %1708 = vrot.lane.b32.xlu0 %v1705, 64
    %v1709 = vpop.permute.xlu0 %1708
    %v1711 = vmul.f32 %v1704, %v1709
    %1713 = vrot.lane.b32.xlu0 %v1711, 32
    %v1714 = vpop.permute.xlu0 %1713
    %v1716 = vadd.f32 %v1706, %v1714
    %v1717 = vtanh.pop %v1716
    %1719 = vrot.lane.b32.xlu0 %v1717, 64
    %v1720 = vpop.permute.xlu0 %1719
    %v1722 = vmul.f32 %v1704, %v1720
    %v1723 = vadd.f32 %v1696, %v505
    %v1724 = vxor.u32 %v1723, 2147483648
    %v1725 = vmul.f32 %v1724, 1.442695
    %v1726 = vpow.pop %v1725
    %v1727 = vadd.f32 %v1726, 1.0
    %v1728 = vrcp.pop %v1727
    %v1729 = vmul.f32 1.0, %v1728
    %v1730 = vtanh.pop %v1723
    %v1731 = vmul.f32 %v1729, %v1539
    %1733 = vrot.lane.b32.xlu0 %v1730, 64
    %v1734 = vpop.permute.xlu0 %1733
    %v1736 = vmul.f32 %v1729, %v1734
    %1738 = vrot.lane.b32.xlu0 %v1736, 32
    %v1739 = vpop.permute.xlu0 %1738
    %v1741 = vadd.f32 %v1731, %v1739
    %v1742 = vtanh.pop %v1741
    %1744 = vrot.lane.b32.xlu0 %v1742, 64
    %v1745 = vpop.permute.xlu0 %1744
    %v1747 = vmul.f32 %v1729, %v1745
    %1749 = vrot.lane.b32.xlu0 %v1747, 32
    %v1750 = vpop.permute.xlu0 %1749
    %v1751 = vsel %vm223, %v1750, 0
    %1753 = vmatprep.subr.mxu0 0.0
    %1754 = vmatpush1.msra.mxu0 0.0
    %1755 = vmatprep.subr.mxu0 0.0
    %1756 = vmatpush1.msra.mxu0 0.0
    %1757 = vmatprep.subr.mxu0 0.0
    %1758 = vmatpush1.msra.mxu0 0.0
    %1759 = vmatprep.subr.mxu0 0.0
    %1760 = vmatpush1.msra.mxu0 0.0
    %1761 = vmatprep.subr.mxu0 0.0
    %1762 = vmatpush1.msra.mxu0 0.0
    %1763 = vmatprep.subr.mxu0 0.0
    %1764 = vmatpush1.msra.mxu0 0.0
    %1765 = vmatprep.subr.mxu0 0.0
    %1766 = vmatpush1.msra.mxu0 0.0
    %1767 = vmatprep.subr.mxu0 0.0
    %1768 = vmatpush1.msra.mxu0 0.0
    %1769 = vmatprep.subr.mxu0 0.0
    %1770 = vmatpush1.msra.mxu0 0.0
    %1771 = vmatprep.subr.mxu0 0.0
    %1772 = vmatpush1.msra.mxu0 0.0
    %1773 = vmatprep.subr.mxu0 0.0
    %1774 = vmatpush1.msra.mxu0 0.0
    %1775 = vmatprep.subr.mxu0 0.0
    %1776 = vmatpush1.msra.mxu0 0.0
    %1777 = vmatprep.subr.mxu0 %v214
    %1778 = vmatpush1.msra.mxu0 %v213
    %1779 = vmatprep.subr.mxu0 %v212
    %1780 = vmatpush1.msra.mxu0 %v211
    %1781 = vmatprep.subr.mxu0 %v210
    %1782 = vmatpush1.msra.mxu0 %v209
    %1783 = vmatprep.subr.mxu0 %v208
    %1784 = vmatpush1.msra.mxu0 %v207
    %1785 = vmatprep.subr.mxu0 0.0
    %1786 = vmatpush2.msra.mxu0 0.0
    %1787 = vmatprep.subr.mxu0 0.0
    %1788 = vmatpush2.msra.mxu0 0.0
    %1789 = vmatprep.subr.mxu0 0.0
    %1790 = vmatpush2.msra.mxu0 0.0
    %1791 = vmatprep.subr.mxu0 0.0
    %1792 = vmatpush2.msra.mxu0 0.0
    %1793 = vmatprep.subr.mxu0 0.0
    %1794 = vmatpush2.msra.mxu0 0.0
    %1795 = vmatprep.subr.mxu0 0.0
    %1796 = vmatpush2.msra.mxu0 0.0
    %1797 = vmatprep.subr.mxu0 0.0
    %1798 = vmatpush2.msra.mxu0 0.0
    %1799 = vmatprep.subr.mxu0 0.0
    %1800 = vmatpush2.msra.mxu0 0.0
    %1801 = vmatprep.subr.mxu0 0.0
    %1802 = vmatpush2.msra.mxu0 0.0
    %1803 = vmatprep.subr.mxu0 0.0
    %1804 = vmatpush2.msra.mxu0 0.0
    %1805 = vmatprep.subr.mxu0 0.0
    %1806 = vmatpush2.msra.mxu0 0.0
    %1807 = vmatprep.subr.mxu0 0.0
    %1808 = vmatpush2.msra.mxu0 0.0
    %1809 = vmatprep.subr.mxu0 0.0
    %1810 = vmatpush2.msra.mxu0 0.0
    %1811 = vmatprep.subr.mxu0 0.0
    %1812 = vmatpush2.msra.mxu0 0.0
    %1813 = vmatprep.subr.mxu0 0.0
    %1814 = vmatpush2.msra.mxu0 0.0
    %1815 = vmatprep.subr.mxu0 0.0
    %1816 = vmatpush2.msra.mxu0 0.0
    %1817 = vmatprep.mubr.f32.mxu0 0.0
    %1818 = vmatmul.mubr.f32.gmra.mxu0 %v1751
    %v1819 = vpop.f32.mrf.mxu0
    %v1820 = vpop.f32.mrf.mxu0
    %v1821 = vadd.f32 0.0, %v1820
    %1822 = vdwg.mxu0
    %1824 = vrot.lane.b32.xlu0 %v1722, 32
    %v1825 = vpop.permute.xlu0 %1824
    %v1826 = vsel %vm223, %v1825, 0
    %1828 = vmatprep.subr.mxu0 0.0
    %1829 = vmatpush1.msra.mxu0 0.0
    %1830 = vmatprep.subr.mxu0 0.0
    %1831 = vmatpush1.msra.mxu0 0.0
    %1832 = vmatprep.subr.mxu0 0.0
    %1833 = vmatpush1.msra.mxu0 0.0
    %1834 = vmatprep.subr.mxu0 0.0
    %1835 = vmatpush1.msra.mxu0 0.0
    %1836 = vmatprep.subr.mxu0 0.0
    %1837 = vmatpush1.msra.mxu0 0.0
    %1838 = vmatprep.subr.mxu0 0.0
    %1839 = vmatpush1.msra.mxu0 0.0
    %1840 = vmatprep.subr.mxu0 0.0
    %1841 = vmatpush1.msra.mxu0 0.0
    %1842 = vmatprep.subr.mxu0 0.0
    %1843 = vmatpush1.msra.mxu0 0.0
    %1844 = vmatprep.subr.mxu0 0.0
    %1845 = vmatpush1.msra.mxu0 0.0
    %1846 = vmatprep.subr.mxu0 0.0
    %1847 = vmatpush1.msra.mxu0 0.0
    %1848 = vmatprep.subr.mxu0 0.0
    %1849 = vmatpush1.msra.mxu0 0.0
    %1850 = vmatprep.subr.mxu0 0.0
    %1851 = vmatpush1.msra.mxu0 0.0
    %1852 = vmatprep.subr.mxu0 %v205
    %1853 = vmatpush1.msra.mxu0 %v204
    %1854 = vmatprep.subr.mxu0 %v203
    %1855 = vmatpush1.msra.mxu0 %v202
    %1856 = vmatprep.subr.mxu0 %v201
    %1857 = vmatpush1.msra.mxu0 %v200
    %1858 = vmatprep.subr.mxu0 %v199
    %1859 = vmatpush1.msra.mxu0 %v198
    %1860 = vmatprep.subr.mxu0 0.0
    %1861 = vmatpush2.msra.mxu0 0.0
    %1862 = vmatprep.subr.mxu0 0.0
    %1863 = vmatpush2.msra.mxu0 0.0
    %1864 = vmatprep.subr.mxu0 0.0
    %1865 = vmatpush2.msra.mxu0 0.0
    %1866 = vmatprep.subr.mxu0 0.0
    %1867 = vmatpush2.msra.mxu0 0.0
    %1868 = vmatprep.subr.mxu0 0.0
    %1869 = vmatpush2.msra.mxu0 0.0
    %1870 = vmatprep.subr.mxu0 0.0
    %1871 = vmatpush2.msra.mxu0 0.0
    %1872 = vmatprep.subr.mxu0 0.0
    %1873 = vmatpush2.msra.mxu0 0.0
    %1874 = vmatprep.subr.mxu0 0.0
    %1875 = vmatpush2.msra.mxu0 0.0
    %1876 = vmatprep.subr.mxu0 0.0
    %1877 = vmatpush2.msra.mxu0 0.0
    %1878 = vmatprep.subr.mxu0 0.0
    %1879 = vmatpush2.msra.mxu0 0.0
    %1880 = vmatprep.subr.mxu0 0.0
    %1881 = vmatpush2.msra.mxu0 0.0
    %1882 = vmatprep.subr.mxu0 0.0
    %1883 = vmatpush2.msra.mxu0 0.0
    %1884 = vmatprep.subr.mxu0 0.0
    %1885 = vmatpush2.msra.mxu0 0.0
    %1886 = vmatprep.subr.mxu0 0.0
    %1887 = vmatpush2.msra.mxu0 0.0
    %1888 = vmatprep.subr.mxu0 0.0
    %1889 = vmatpush2.msra.mxu0 0.0
    %1890 = vmatprep.subr.mxu0 0.0
    %1891 = vmatpush2.msra.mxu0 0.0
    %1892 = vmatprep.mubr.f32.mxu0 0.0
    %1893 = vmatmul.mubr.f32.gmra.mxu0 %v1826
    %v1894 = vpop.f32.mrf.mxu0
    %v1895 = vpop.f32.mrf.mxu0
    %v1896 = vadd.f32 %v1821, %v1895
    %1897 = vdwg.mxu0
    %v1898 = vadd.f32 %v1896, %v505
    %v1899 = vxor.u32 %v1898, 2147483648
    %v1900 = vmul.f32 %v1899, 1.442695
    %v1901 = vpow.pop %v1900
    %v1902 = vadd.f32 %v1901, 1.0
    %v1903 = vrcp.pop %v1902
    %v1904 = vmul.f32 1.0, %v1903
    %v1905 = vtanh.pop %v1898
    %v1906 = vmul.f32 %v1904, %v1741
    %1908 = vrot.lane.b32.xlu0 %v1905, 64
    %v1909 = vpop.permute.xlu0 %1908
    %v1911 = vmul.f32 %v1904, %v1909
    %1913 = vrot.lane.b32.xlu0 %v1911, 32
    %v1914 = vpop.permute.xlu0 %1913
    %v1916 = vadd.f32 %v1906, %v1914
    %v1917 = vtanh.pop %v1916
    %1919 = vrot.lane.b32.xlu0 %v1917, 64
    %v1920 = vpop.permute.xlu0 %1919
    %v1922 = vmul.f32 %v1904, %v1920
    %1924 = vst.msk [vmem:[#allocation5] sm:$0xff] %vm223, %v1825
    %1926 = vrot.lane.b32.xlu0 %v1716, 96
    %v1927 = vpop.permute.xlu0 %1926
    %1929 = vst.msk [vmem:[#allocation6] sm:$0xff] %vm223, %v1927
    %1931 = vrot.lane.b32.xlu0 %v1922, 32
    %v1932 = vpop.permute.xlu0 %1931
    %s1934 = scalar_lea.vmem [#allocation5], 8
    %1935 = vst.msk [vmem:[%s1934] sm:$0xff] %vm223, %v1932
    %1937 = vrot.lane.b32.xlu0 %v1916, 96
    %v1938 = vpop.permute.xlu0 %1937
    %s1940 = scalar_lea.vmem [#allocation6], 8
    %1941 = vst.msk [vmem:[%s1940] sm:$0xff] %vm223, %v1938
    %v1942 = vld [vmem:[%s6] sm:$0xff]
    %v1943 = vld [vmem:[%s6 + $0x8] sm:$0xff]
    %v1944 = vld [vmem:[%s6 + $0x10] sm:$0xff]
    %v1945 = vld [vmem:[%s6 + $0x18] sm:$0xff]
    %v1946 = vld [vmem:[%s7] sm:$0x1]
    %v1948 = vlaneseq
    %v1949 = vshrl.u32 %v1948, 7
    %v1950 = vsub.s32 0, %v1949
    %v1951 = vrot.slane %v1946, %v1950
    %v1953 = vsel %vm223, %v1932, 0
    %1955 = vmatprep.subr.mxu0 0.0
    %1956 = vmatpush1.msra.mxu0 0.0
    %1957 = vmatprep.subr.mxu0 0.0
    %1958 = vmatpush1.msra.mxu0 0.0
    %1959 = vmatprep.subr.mxu0 0.0
    %1960 = vmatpush1.msra.mxu0 0.0
    %1961 = vmatprep.subr.mxu0 0.0
    %1962 = vmatpush1.msra.mxu0 0.0
    %1963 = vmatprep.subr.mxu0 0.0
    %1964 = vmatpush1.msra.mxu0 0.0
    %1965 = vmatprep.subr.mxu0 0.0
    %1966 = vmatpush1.msra.mxu0 0.0
    %1967 = vmatprep.subr.mxu0 0.0
    %1968 = vmatpush1.msra.mxu0 0.0
    %1969 = vmatprep.subr.mxu0 0.0
    %1970 = vmatpush1.msra.mxu0 0.0
    %1971 = vmatprep.subr.mxu0 0.0
    %1972 = vmatpush1.msra.mxu0 0.0
    %1973 = vmatprep.subr.mxu0 0.0
    %1974 = vmatpush1.msra.mxu0 0.0
    %1975 = vmatprep.subr.mxu0 0.0
    %1976 = vmatpush1.msra.mxu0 0.0
    %1977 = vmatprep.subr.mxu0 0.0
    %1978 = vmatpush1.msra.mxu0 0.0
    %1979 = vmatprep.subr.mxu0 0.0
    %1980 = vmatpush1.msra.mxu0 %v1945
    %1981 = vmatprep.subr.mxu0 0.0
    %1982 = vmatpush1.msra.mxu0 %v1944
    %1983 = vmatprep.subr.mxu0 0.0
    %1984 = vmatpush1.msra.mxu0 %v1943
    %1985 = vmatprep.subr.mxu0 0.0
    %1986 = vmatpush1.msra.mxu0 %v1942
    %1987 = vmatprep.subr.mxu0 0.0
    %1988 = vmatpush2.msra.mxu0 0.0
    %1989 = vmatprep.subr.mxu0 0.0
    %1990 = vmatpush2.msra.mxu0 0.0
    %1991 = vmatprep.subr.mxu0 0.0
    %1992 = vmatpush2.msra.mxu0 0.0
    %1993 = vmatprep.subr.mxu0 0.0
    %1994 = vmatpush2.msra.mxu0 0.0
    %1995 = vmatprep.subr.mxu0 0.0
    %1996 = vmatpush2.msra.mxu0 0.0
    %1997 = vmatprep.subr.mxu0 0.0
    %1998 = vmatpush2.msra.mxu0 0.0
    %1999 = vmatprep.subr.mxu0 0.0
    %2000 = vmatpush2.msra.mxu0 0.0
    %2001 = vmatprep.subr.mxu0 0.0
    %2002 = vmatpush2.msra.mxu0 0.0
    %2003 = vmatprep.subr.mxu0 0.0
    %2004 = vmatpush2.msra.mxu0 0.0
    %2005 = vmatprep.subr.mxu0 0.0
    %2006 = vmatpush2.msra.mxu0 0.0
    %2007 = vmatprep.subr.mxu0 0.0
    %2008 = vmatpush2.msra.mxu0 0.0
    %2009 = vmatprep.subr.mxu0 0.0
    %2010 = vmatpush2.msra.mxu0 0.0
    %2011 = vmatprep.subr.mxu0 0.0
    %2012 = vmatpush2.msra.mxu0 0.0
    %2013 = vmatprep.subr.mxu0 0.0
    %2014 = vmatpush2.msra.mxu0 0.0
    %2015 = vmatprep.subr.mxu0 0.0
    %2016 = vmatpush2.msra.mxu0 0.0
    %2017 = vmatprep.subr.mxu0 0.0
    %2018 = vmatpush2.msra.mxu0 0.0
    %2019 = vmatprep.mubr.f32.mxu0 0.0
    %2020 = vmatmul.mubr.f32.gmra.mxu0 %v539
    %v2021 = vpop.f32.mrf.mxu0
    %v2022 = vadd.f32 %v1951, %v2021
    %v2023 = vpop.f32.mrf.mxu0
    %2024 = vmatprep.mubr.f32.mxu0 0.0
    %2025 = vmatmul.mubr.f32.gmra.mxu0 %v741
    %v2026 = vpop.f32.mrf.mxu0
    %v2027 = vadd.f32 %v1951, %v2026
    %v2028 = vpop.f32.mrf.mxu0
    %2029 = vmatprep.mubr.f32.mxu0 0.0
    %2030 = vmatmul.mubr.f32.gmra.mxu0 %v943
    %v2031 = vpop.f32.mrf.mxu0
    %v2032 = vadd.f32 %v1951, %v2031
    %v2033 = vpop.f32.mrf.mxu0
    %2034 = vmatprep.mubr.f32.mxu0 0.0
    %2035 = vmatmul.mubr.f32.gmra.mxu0 %v1145
    %v2036 = vpop.f32.mrf.mxu0
    %v2037 = vadd.f32 %v1951, %v2036
    %v2038 = vpop.f32.mrf.mxu0
    %2039 = vmatprep.mubr.f32.mxu0 0.0
    %2040 = vmatmul.mubr.f32.gmra.mxu0 %v1347
    %v2041 = vpop.f32.mrf.mxu0
    %v2042 = vadd.f32 %v1951, %v2041
    %v2043 = vpop.f32.mrf.mxu0
    %2044 = vmatprep.mubr.f32.mxu0 0.0
    %2045 = vmatmul.mubr.f32.gmra.mxu0 %v1549
    %v2046 = vpop.f32.mrf.mxu0
    %v2047 = vadd.f32 %v1951, %v2046
    %v2048 = vpop.f32.mrf.mxu0
    %2049 = vmatprep.mubr.f32.mxu0 0.0
    %2050 = vmatmul.mubr.f32.gmra.mxu0 %v1751
    %v2051 = vpop.f32.mrf.mxu0
    %v2052 = vadd.f32 %v1951, %v2051
    %v2053 = vpop.f32.mrf.mxu0
    %2054 = vmatprep.mubr.f32.mxu0 0.0
    %2055 = vmatmul.mubr.f32.gmra.mxu0 %v1953
    %v2056 = vpop.f32.mrf.mxu0
    %v2057 = vadd.f32 %v1951, %v2056
    %v2058 = vpop.f32.mrf.mxu0
    %2059 = vdwg.mxu0
    %vm2060 = vcmask 64512
    %v2061 = vsel %vm2060, %v2022, -inf
    %2062 = vmax.xlane.f32.xlu0 %v2061
    %v2063 = vpop.xlane.xlu0 %2062
    %v2064 = vsel %vm2060, %v2027, -inf
    %2065 = vmax.xlane.f32.xlu0 %v2064
    %v2066 = vpop.xlane.xlu0 %2065
    %v2067 = vsel %vm2060, %v2032, -inf
    %2068 = vmax.xlane.f32.xlu0 %v2067
    %v2069 = vpop.xlane.xlu0 %2068
    %v2070 = vsel %vm2060, %v2037, -inf
    %2071 = vmax.xlane.f32.xlu0 %v2070
    %v2072 = vpop.xlane.xlu0 %2071
    %v2073 = vsel %vm2060, %v2042, -inf
    %2074 = vmax.xlane.f32.xlu0 %v2073
    %v2075 = vpop.xlane.xlu0 %2074
    %v2076 = vsel %vm2060, %v2047, -inf
    %2077 = vmax.xlane.f32.xlu0 %v2076
    %v2078 = vpop.xlane.xlu0 %2077
    %v2079 = vsel %vm2060, %v2052, -inf
    %2080 = vmax.xlane.f32.xlu0 %v2079
    %v2081 = vpop.xlane.xlu0 %2080
    %v2082 = vsel %vm2060, %v2057, -inf
    %2083 = vmax.xlane.f32.xlu0 %v2082
    %v2084 = vpop.xlane.xlu0 %2083
    %v2085 = vsub.f32 %v2022, %v2063
    %v2086 = vsub.f32 %v2027, %v2066
    %v2087 = vsub.f32 %v2032, %v2069
    %v2088 = vsub.f32 %v2037, %v2072
    %v2089 = vsub.f32 %v2042, %v2075
    %v2090 = vsub.f32 %v2047, %v2078
    %v2091 = vsub.f32 %v2052, %v2081
    %v2092 = vsub.f32 %v2057, %v2084
    %v2093 = vmul.f32 %v2085, 1.442695
    %v2094 = vpow.pop %v2093
    %v2095 = vmul.f32 %v2086, 1.442695
    %v2096 = vpow.pop %v2095
    %v2097 = vmul.f32 %v2087, 1.442695
    %v2098 = vpow.pop %v2097
    %v2099 = vmul.f32 %v2088, 1.442695
    %v2100 = vpow.pop %v2099
    %v2101 = vmul.f32 %v2089, 1.442695
    %v2102 = vpow.pop %v2101
    %v2103 = vmul.f32 %v2090, 1.442695
    %v2104 = vpow.pop %v2103
    %v2105 = vmul.f32 %v2091, 1.442695
    %v2106 = vpow.pop %v2105
    %v2107 = vmul.f32 %v2092, 1.442695
    %v2108 = vpow.pop %v2107
    %v2109 = vsel %vm2060, %v2094, 0.0
    %2110 = vadd.xlane.f32.xlu0 %v2109
    %v2111 = vpop.xlane.xlu0 %2110
    %v2112 = vsel %vm2060, %v2096, 0.0
    %2113 = vadd.xlane.f32.xlu0 %v2112
    %v2114 = vpop.xlane.xlu0 %2113
    %v2115 = vsel %vm2060, %v2098, 0.0
    %2116 = vadd.xlane.f32.xlu0 %v2115
    %v2117 = vpop.xlane.xlu0 %2116
    %v2118 = vsel %vm2060, %v2100, 0.0
    %2119 = vadd.xlane.f32.xlu0 %v2118
    %v2120 = vpop.xlane.xlu0 %2119
    %v2121 = vsel %vm2060, %v2102, 0.0
    %2122 = vadd.xlane.f32.xlu0 %v2121
    %v2123 = vpop.xlane.xlu0 %2122
    %v2124 = vsel %vm2060, %v2104, 0.0
    %2125 = vadd.xlane.f32.xlu0 %v2124
    %v2126 = vpop.xlane.xlu0 %2125
    %v2127 = vsel %vm2060, %v2106, 0.0
    %2128 = vadd.xlane.f32.xlu0 %v2127
    %v2129 = vpop.xlane.xlu0 %2128
    %v2130 = vsel %vm2060, %v2108, 0.0
    %2131 = vadd.xlane.f32.xlu0 %v2130
    %v2132 = vpop.xlane.xlu0 %2131
    %v2133 = vlog2.pop %v2111
    %v2134 = vmul.f32 %v2133, 0.6931472
    %v2135 = vlog2.pop %v2114
    %v2136 = vmul.f32 %v2135, 0.6931472
    %v2137 = vlog2.pop %v2117
    %v2138 = vmul.f32 %v2137, 0.6931472
    %v2139 = vlog2.pop %v2120
    %v2140 = vmul.f32 %v2139, 0.6931472
    %v2141 = vlog2.pop %v2123
    %v2142 = vmul.f32 %v2141, 0.6931472
    %v2143 = vlog2.pop %v2126
    %v2144 = vmul.f32 %v2143, 0.6931472
    %v2145 = vlog2.pop %v2129
    %v2146 = vmul.f32 %v2145, 0.6931472
    %v2147 = vlog2.pop %v2132
    %v2148 = vmul.f32 %v2147, 0.6931472
    %v2149 = vsub.f32 %v2085, %v2134
    %v2150 = vsub.f32 %v2086, %v2136
    %v2151 = vsub.f32 %v2087, %v2138
    %v2152 = vsub.f32 %v2088, %v2140
    %v2153 = vsub.f32 %v2089, %v2142
    %v2154 = vsub.f32 %v2090, %v2144
    %v2155 = vsub.f32 %v2091, %v2146
    %v2156 = vsub.f32 %v2092, %v2148
    %2157 = vst.msk [vmem:[%s8] sm:$0xff] %vm2060, %v2149
    %2158 = vst.msk [vmem:[%s8 + $0x8] sm:$0xff] %vm2060, %v2150
    %2159 = vst.msk [vmem:[%s8 + $0x10] sm:$0xff] %vm2060, %v2151
    %2160 = vst.msk [vmem:[%s8 + $0x18] sm:$0xff] %vm2060, %v2152
    %2161 = vst.msk [vmem:[%s8 + $0x20] sm:$0xff] %vm2060, %v2153
    %2162 = vst.msk [vmem:[%s8 + $0x28] sm:$0xff] %vm2060, %v2154
    %2163 = vst.msk [vmem:[%s8 + $0x30] sm:$0xff] %vm2060, %v2155
    %2164 = vst.msk [vmem:[%s8 + $0x38] sm:$0xff] %vm2060, %v2156
    // Predicated region
    $region38: #{tpu_custom_call.1} parent=1 // pred_check
      _
    $region39: #{tpu_custom_call.1} parent=1 // pred_check_branch
      %2166 = sbr.rel (0) target = $region41
    $region40: #{tpu_custom_call.1} parent=1 // pred_region
      _
    $region41: #{tpu_custom_call.1} parent=1 // pred_fallthru
      _
    // Predicated region
    $region42: #{tpu_custom_call.1} parent=1 // pred_check
      _
    $region43: #{tpu_custom_call.1} parent=1 // pred_check_branch
      %2168 = sbr.rel (0) target = $region45
    $region44: #{tpu_custom_call.1} parent=1 // pred_region
      %s2170 = ssub.s32 256, 256
      %2171 = vsyncadd [#allocation4], %s2170
      %s2172 = sshll.u32 [#allocation5], 4
      %s2173 = int_to_ptr.vmem [resolvable:$true] %s2172
      %2178 = dma.vmem_to_hbm [thread:$0]  %s2173, 256, %s9, [#allocation4], 128, 128, 8
    $region45: #{tpu_custom_call.1} parent=1 // pred_fallthru
      _
    // Predicated region
    $region46: #{tpu_custom_call.1} parent=1 // pred_check
      _
    $region47: #{tpu_custom_call.1} parent=1 // pred_check_branch
      %2180 = sbr.rel (0) target = $region49
    $region48: #{tpu_custom_call.1} parent=1 // pred_region
      %s2182 = ssub.s32 256, 256
      %2183 = vsyncadd [#allocation7], %s2182
      %s2184 = sshll.u32 [#allocation6], 4
      %s2185 = int_to_ptr.vmem [resolvable:$true] %s2184
      %2190 = dma.vmem_to_hbm [thread:$0]  %s2185, 256, %s10, [#allocation7], 128, 128, 8
    $region49: #{tpu_custom_call.1} parent=1 // pred_fallthru
      _
    // Predicated region
    $region50: #{tpu_custom_call.1} parent=1 // pred_check
      _
    $region51: #{tpu_custom_call.1} parent=1 // pred_check_branch
      %2192 = sbr.rel (0) target = $region53
    $region52: #{tpu_custom_call.1} parent=1 // pred_region
      _
    $region53: #{tpu_custom_call.1} parent=1 // pred_fallthru
      _
    // Predicated region
    $region54: #{tpu_custom_call.1} parent=1 // pred_check
      _
    $region55: #{tpu_custom_call.1} parent=1 // pred_check_branch
      %2194 = sbr.rel (0) target = $region57
    $region56: #{tpu_custom_call.1} parent=1 // pred_region
      %2195 = dma.done [#allocation4], 256
    $region57: #{tpu_custom_call.1} parent=1 // pred_fallthru
      _
    // Predicated region
    $region58: #{tpu_custom_call.1} parent=1 // pred_check
      _
    $region59: #{tpu_custom_call.1} parent=1 // pred_check_branch
      %2197 = sbr.rel (0) target = $region61
    $region60: #{tpu_custom_call.1} parent=1 // pred_region
      %2198 = dma.done [#allocation7], 256
    $region61: #{tpu_custom_call.1} parent=1 // pred_fallthru
      _
    %2199 = vsyncpa [#allocation3], 1
    %2200 = vsyncpa [#allocation4], 1
    %2201 = vsyncpa [#allocation7], 1

</llo_original>
